<compile_context>
chip_gen: v7x
topology: tpu7x:2x2x1
jax: 0.10.0
libtpu: 0.0.40
codegen_flags: <defaults>
</compile_context>

<pallas_src>
import jax
import jax.numpy as jnp
from jax.experimental import pallas as pl
from jax.experimental.pallas import tpu as pltpu


def _expand_vpu(a, w):
    """(N, Cr) @ (Cr, C) expansion.

    For Cr <= 8 this is done as Cr broadcast-FMAs on the VPU instead of a
    lane-starved K=Cr MXU matmul; otherwise fall back to the MXU.
    """
    cr = w.shape[0]
    if cr > 8:
        return jnp.dot(a, w, preferred_element_type=jnp.float32)
    acc = a[:, 0:1] * w[0:1, :]
    for k in range(1, cr):
        acc = acc + a[:, k:k + 1] * w[k:k + 1, :]
    return acc


def _fuse_kernel(x_ref, w1_ref, wsq_ref, wexp_ref, bns_ref, bnb_ref, out_ref):
    _, H, W, C = out_ref.shape
    x = x_ref[0]                                   # (H*W, 2C) bf16

    # ---- fused 1x1 conv: ONE MXU matmul, K = 2C, bf16 x bf16 -> f32 acc -----
    c = jnp.dot(x, w1_ref[...], preferred_element_type=jnp.float32)   # (H*W, C)

    # ---- coordinate pooling (f32 tail) ---------------------------------------
    xf = x.astype(jnp.float32).reshape(H, W, 2 * C)
    pool_h = jnp.mean(xf, axis=1)                  # (H, 2C): [:, :C]=rgb, [:, C:]=t
    pool_w = jnp.mean(xf, axis=0)                  # (W, 2C)

    # ---- merged squeeze: block-diag [wa1 0; 0 wa2] -> 2 matmuls (was 4) ------
    sq_h = jnp.dot(pool_h, wsq_ref[...], preferred_element_type=jnp.float32)  # (H, 2Cr)
    sq_w = jnp.dot(pool_w, wsq_ref[...], preferred_element_type=jnp.float32)  # (W, 2Cr)
    Cr = sq_h.shape[1] // 2

    bn_scale = bns_ref[...]                        # (1, Cr) folded eval-mode bn1
    bn_shift = bnb_ref[...]                        # (1, Cr)
    a_h = jnp.maximum(sq_h[:, :Cr] * bn_scale + bn_shift, 0.0)   # rgb, h  (H, Cr)
    a_w = jnp.maximum(sq_w[:, :Cr] * bn_scale + bn_shift, 0.0)   # rgb, w  (W, Cr)
    b_h = jnp.maximum(sq_h[:, Cr:], 0.0)                         # t,   h  (H, Cr)
    b_w = jnp.maximum(sq_w[:, Cr:], 0.0)                         # t,   w  (W, Cr)

    # ---- expand (K = Cr) on the VPU, sigmoid on the EUP ----------------------
    rgb_s_h = jax.nn.sigmoid(_expand_vpu(a_h, wexp_ref[0]))      # (H, C)
    rgb_s_w = jax.nn.sigmoid(_expand_vpu(a_w, wexp_ref[1]))      # (W, C)
    t_s_h = jax.nn.sigmoid(_expand_vpu(b_h, wexp_ref[2]))        # (H, C)
    t_s_w = jax.nn.sigmoid(_expand_vpu(b_w, wexp_ref[3]))        # (W, C)

    # ---- fuse: out = c * (s_h1*s_w1 + s_h2*s_w2), attn folded into the store -
    out_ref[0] = (c.reshape(H, W, C) *
                  (rgb_s_h[:, None, :] * rgb_s_w[None, :, :] +
                   t_s_h[:, None, :] * t_s_w[None, :, :])).astype(out_ref.dtype)


def fuse_block_ca_v2(rgb, t, params):
    """rgb, t: (B, H, W, C) float32 NHWC.  Returns (B, H, W, C) bfloat16."""
    B, H, W, C = rgb.shape
    (w1r, w1t, wa1, wa2, wfh1, wfw1, wfh2, wfw2, bn_scale, bn_shift) = params
    Cr = wa1.shape[1]

    # bf16 I/O: XLA fuses the convert into the concat/reshape, so this is a
    # single pass over the inputs and halves the HBM traffic the kernel streams.
    x = (jnp.concatenate([rgb, t], axis=-1)
         .astype(jnp.bfloat16)
         .reshape(B, H * W, 2 * C))                               # (B, H*W, 2C)
    w1 = jnp.concatenate([w1r, w1t], axis=0).astype(jnp.bfloat16)  # (2C, C)

    # Block-diagonal squeeze weight [wa1 0; 0 wa2] -> rgb and t squeeze convs
    # share one MXU op per pooling direction.
    wsq = jnp.zeros((2 * C, 2 * Cr), jnp.float32)
    wsq = wsq.at[:C, :Cr].set(wa1).at[C:, Cr:].set(wa2)

    # Expand weights stacked into a single operand (one DMA instead of four).
    wexp = jnp.stack([wfh1, wfw1, wfh2, wfw2], axis=0)            # (4, Cr, C)

    # Weights/BN params are grid-invariant (constant index_map), so they are
    # DMA'd once and never re-fetched across grid steps.
    full = lambda shape: pl.BlockSpec(shape, lambda b: tuple(0 for _ in shape))

    grid_spec = pltpu.PrefetchScalarGridSpec(
        num_scalar_prefetch=0,
        grid=(B,),                       # B=2 -> one batch element per v7x TC
        in_specs=[
            pl.BlockSpec((1, H * W, 2 * C), lambda b: (b, 0, 0)),  # x (bf16)
            full((2 * C, C)),            # fused conv1x1 weight (bf16)
            full((2 * C, 2 * Cr)),       # merged squeeze weight (f32)
            full((4, Cr, C)),            # stacked expand weights (f32)
            full((1, Cr)),               # folded bn1 scale
            full((1, Cr)),               # folded bn1 shift
        ],
        out_specs=pl.BlockSpec((1, H, W, C), lambda b: (b, 0, 0, 0)),
    )

    return pl.pallas_call(
        _fuse_kernel,
        out_shape=jax.ShapeDtypeStruct((B, H, W, C), jnp.bfloat16),
        grid_spec=grid_spec,
        compiler_params=pltpu.CompilerParams(
            dimension_semantics=("parallel",)),
    )(x, w1, wsq, wexp, bn_scale, bn_shift)


def reference(rgb, t, params):
    """Pure-JAX NHWC re-statement of the torch forward (eval-mode BN), in f32."""
    (w1r, w1t, wa1, wa2, wfh1, wfw1, wfh2, wfw2, bn_scale, bn_shift) = params
    c = (jnp.einsum('bhwc,cd->bhwd', rgb, w1r) +
         jnp.einsum('bhwc,cd->bhwd', t, w1t))
    rgb_h = rgb.mean(axis=2)                       # (B, H, C)
    rgb_w = rgb.mean(axis=1)                       # (B, W, C)
    a_h = jax.nn.relu(jnp.einsum('bhc,cr->bhr', rgb_h, wa1) * bn_scale + bn_shift)
    a_w = jax.nn.relu(jnp.einsum('bwc,cr->bwr', rgb_w, wa1) * bn_scale + bn_shift)
    rgb_s_h = jax.nn.sigmoid(jnp.einsum('bhr,rc->bhc', a_h, wfh1))
    rgb_s_w = jax.nn.sigmoid(jnp.einsum('bwr,rc->bwc', a_w, wfw1))
    t_h = t.mean(axis=2)
    t_w = t.mean(axis=1)
    b_h = jax.nn.relu(jnp.einsum('bhc,cr->bhr', t_h, wa2))
    b_w = jax.nn.relu(jnp.einsum('bwc,cr->bwr', t_w, wa2))
    t_s_h = jax.nn.sigmoid(jnp.einsum('bhr,rc->bhc', b_h, wfh2))
    t_s_w = jax.nn.sigmoid(jnp.einsum('bwr,rc->bwc', b_w, wfw2))
    attn = (rgb_s_h[:, :, None, :] * rgb_s_w[:, None, :, :] +
            t_s_h[:, :, None, :] * t_s_w[:, None, :, :])
    return c * attn


if __name__ == "__main__":
    # Small deterministic problem: torch-equivalent inputs would be NCHW
    # rgb, t: (2, 32, 16, 16); kernel layout is NHWC (2, 16, 16, 32).
    B, C, H, Wd = 2, 32, 16, 16
    reduction = 16
    Cr = C // reduction

    key = jax.random.PRNGKey(0)
    ks = jax.random.split(key, 12)

    rgb = jax.random.normal(ks[0], (B, H, Wd, C), jnp.float32)
    t = jax.random.normal(ks[1], (B, H, Wd, C), jnp.float32)

    s = 0.1
    w1r = s * jax.random.normal(ks[2], (C, C), jnp.float32)    # conv1x1 weight, rgb half
    w1t = s * jax.random.normal(ks[3], (C, C), jnp.float32)    # conv1x1 weight, t half
    wa1 = s * jax.random.normal(ks[4], (C, Cr), jnp.float32)   # conv_1x1_1
    wa2 = s * jax.random.normal(ks[5], (C, Cr), jnp.float32)   # conv_1x1_2
    wfh1 = s * jax.random.normal(ks[6], (Cr, C), jnp.float32)  # F_h1
    wfw1 = s * jax.random.normal(ks[7], (Cr, C), jnp.float32)  # F_w1
    wfh2 = s * jax.random.normal(ks[8], (Cr, C), jnp.float32)  # F_h2
    wfw2 = s * jax.random.normal(ks[9], (Cr, C), jnp.float32)  # F_w2

    # bn1 (eval mode): fold gamma/beta/running stats into scale & shift.
    gamma = 1.0 + 0.1 * jax.random.normal(ks[10], (1, Cr), jnp.float32)
    beta = 0.1 * jax.random.normal(ks[11], (1, Cr), jnp.float32)
    run_mean = jnp.zeros((1, Cr), jnp.float32)
    run_var = jnp.ones((1, Cr), jnp.float32)
    eps = 1e-5
    bn_scale = gamma / jnp.sqrt(run_var + eps)
    bn_shift = beta - run_mean * bn_scale

    params = (w1r, w1t, wa1, wa2, wfh1, wfw1, wfh2, wfw2, bn_scale, bn_shift)

    out = jax.block_until_ready(fuse_block_ca_v2(rgb, t, params))

    # Reference on the same bf16-quantized streaming operands (the kernel
    # streams rgb/t and the big conv weight in bf16 and stores bf16 output),
    # compared at bf16-level tolerance.
    q = lambda a: a.astype(jnp.bfloat16).astype(jnp.float32)
    ref_params = (q(w1r), q(w1t), wa1, wa2, wfh1, wfw1, wfh2, wfw2,
                  bn_scale, bn_shift)
    ref = jax.block_until_ready(reference(q(rgb), q(t), ref_params))

    assert out.shape == (B, H, Wd, C)
    assert out.dtype == jnp.bfloat16
    err = float(jnp.max(jnp.abs(out.astype(jnp.float32) - ref)))
    assert jnp.allclose(out.astype(jnp.float32), ref, atol=1e-2, rtol=1e-2), err

    print("KERNEL_OK")
</pallas_src>

<mosaic_0001>
module attributes {stable_mosaic.version = 11 : i64} {
  func.func @_fuse_kernel(%arg0: i32, %arg1: memref<1x256x64xbf16, #tpu.memory_space<vmem>>, %arg2: memref<64x32xbf16, #tpu.memory_space<vmem>>, %arg3: memref<64x4xf32, #tpu.memory_space<vmem>>, %arg4: memref<4x2x32xf32, #tpu.memory_space<vmem>>, %arg5: memref<1x2xf32, #tpu.memory_space<vmem>>, %arg6: memref<1x2xf32, #tpu.memory_space<vmem>>, %arg7: memref<1x16x16x32xbf16, #tpu.memory_space<vmem>>) attributes {dimension_semantics = [#tpu.dimension_semantics<parallel>], iteration_bounds = array<i64: 2>, scalar_prefetch = 0 : i64, scratch_operands = 0 : i64, tpu.core_type = #tpu.core_type<tc>, window_params = [{transform_indices = @transform_0, window_bounds = array<i64: 1, 256, 64>}, {pipeline_mode = #tpu.pipeline_mode<synchronous>, transform_indices = @transform_1, window_bounds = array<i64: 64, 32>}, {pipeline_mode = #tpu.pipeline_mode<synchronous>, transform_indices = @transform_2, window_bounds = array<i64: 64, 4>}, {pipeline_mode = #tpu.pipeline_mode<synchronous>, transform_indices = @transform_3, window_bounds = array<i64: 4, 2, 32>}, {pipeline_mode = #tpu.pipeline_mode<synchronous>, transform_indices = @transform_4, window_bounds = array<i64: 1, 2>}, {pipeline_mode = #tpu.pipeline_mode<synchronous>, transform_indices = @transform_5, window_bounds = array<i64: 1, 2>}, {transform_indices = @transform_6, window_bounds = array<i64: 1, 16, 16, 32>}]} {
    %c0 = arith.constant 0 : index
    %c0_0 = arith.constant 0 : index
    %c0_1 = arith.constant 0 : index
    %0 = vector.load %arg1[%c0, %c0_0, %c0_1] : memref<1x256x64xbf16, #tpu.memory_space<vmem>>, vector<1x256x64xbf16>
    %1 = vector.shape_cast %0 : vector<1x256x64xbf16> to vector<256x64xbf16>
    %c0_2 = arith.constant 0 : index
    %c0_3 = arith.constant 0 : index
    %2 = vector.load %arg2[%c0_2, %c0_3] : memref<64x32xbf16, #tpu.memory_space<vmem>>, vector<64x32xbf16>
    %cst = arith.constant dense<0.000000e+00> : vector<256x32xf32>
    %3 = tpu.matmul %1, %2, %cst {dimension_numbers = #tpu.dot_dimension_numbers<[1], [0], [0], [1], [0, 0, 1, 1], [], []>} : vector<256x64xbf16>, vector<64x32xbf16>, vector<256x32xf32> -> vector<256x32xf32>
    %4 = arith.extf %1 : vector<256x64xbf16> to vector<256x64xf32>
    %5 = vector.shape_cast %4 : vector<256x64xf32> to vector<16x16x64xf32>
    %cst_4 = arith.constant dense<0.000000e+00> : vector<16x64xf32>
    %6 = vector.multi_reduction <add>, %5, %cst_4 [1] : vector<16x16x64xf32> to vector<16x64xf32>
    %cst_5 = arith.constant 1.600000e+01 : f32
    %7 = vector.broadcast %cst_5 : f32 to vector<16x64xf32>
    %8 = arith.divf %6, %7 : vector<16x64xf32>
    %cst_6 = arith.constant dense<0.000000e+00> : vector<16x64xf32>
    %9 = vector.multi_reduction <add>, %5, %cst_6 [0] : vector<16x16x64xf32> to vector<16x64xf32>
    %cst_7 = arith.constant 1.600000e+01 : f32
    %10 = vector.broadcast %cst_7 : f32 to vector<16x64xf32>
    %11 = arith.divf %9, %10 : vector<16x64xf32>
    %c0_8 = arith.constant 0 : index
    %c0_9 = arith.constant 0 : index
    %12 = vector.load %arg3[%c0_8, %c0_9] : memref<64x4xf32, #tpu.memory_space<vmem>>, vector<64x4xf32>
    %cst_10 = arith.constant dense<0.000000e+00> : vector<16x4xf32>
    %13 = tpu.matmul %8, %12, %cst_10 {dimension_numbers = #tpu.dot_dimension_numbers<[1], [0], [0], [1], [0, 0, 1, 1], [], []>} : vector<16x64xf32>, vector<64x4xf32>, vector<16x4xf32> -> vector<16x4xf32>
    %c0_11 = arith.constant 0 : index
    %c0_12 = arith.constant 0 : index
    %14 = vector.load %arg3[%c0_11, %c0_12] : memref<64x4xf32, #tpu.memory_space<vmem>>, vector<64x4xf32>
    %cst_13 = arith.constant dense<0.000000e+00> : vector<16x4xf32>
    %15 = tpu.matmul %11, %14, %cst_13 {dimension_numbers = #tpu.dot_dimension_numbers<[1], [0], [0], [1], [0, 0, 1, 1], [], []>} : vector<16x64xf32>, vector<64x4xf32>, vector<16x4xf32> -> vector<16x4xf32>
    %c0_14 = arith.constant 0 : index
    %c0_15 = arith.constant 0 : index
    %16 = vector.load %arg5[%c0_14, %c0_15] : memref<1x2xf32, #tpu.memory_space<vmem>>, vector<1x2xf32>
    %c0_16 = arith.constant 0 : index
    %c0_17 = arith.constant 0 : index
    %17 = vector.load %arg6[%c0_16, %c0_17] : memref<1x2xf32, #tpu.memory_space<vmem>>, vector<1x2xf32>
    %18 = vector.extract_strided_slice %13 {offsets = [0, 0], sizes = [16, 2], strides = [1, 1]} : vector<16x4xf32> to vector<16x2xf32>
    %19 = vector.broadcast %16 : vector<1x2xf32> to vector<16x2xf32>
    %20 = arith.mulf %18, %19 : vector<16x2xf32>
    %21 = vector.broadcast %17 : vector<1x2xf32> to vector<16x2xf32>
    %22 = arith.addf %20, %21 : vector<16x2xf32>
    %cst_18 = arith.constant 0.000000e+00 : f32
    %23 = vector.broadcast %cst_18 : f32 to vector<16x2xf32>
    %24 = arith.maximumf %22, %23 : vector<16x2xf32>
    %25 = vector.extract_strided_slice %15 {offsets = [0, 0], sizes = [16, 2], strides = [1, 1]} : vector<16x4xf32> to vector<16x2xf32>
    %26 = vector.broadcast %16 : vector<1x2xf32> to vector<16x2xf32>
    %27 = arith.mulf %25, %26 : vector<16x2xf32>
    %28 = vector.broadcast %17 : vector<1x2xf32> to vector<16x2xf32>
    %29 = arith.addf %27, %28 : vector<16x2xf32>
    %cst_19 = arith.constant 0.000000e+00 : f32
    %30 = vector.broadcast %cst_19 : f32 to vector<16x2xf32>
    %31 = arith.maximumf %29, %30 : vector<16x2xf32>
    %32 = vector.extract_strided_slice %13 {offsets = [0, 2], sizes = [16, 2], strides = [1, 1]} : vector<16x4xf32> to vector<16x2xf32>
    %cst_20 = arith.constant 0.000000e+00 : f32
    %33 = vector.broadcast %cst_20 : f32 to vector<16x2xf32>
    %34 = arith.maximumf %32, %33 : vector<16x2xf32>
    %35 = vector.extract_strided_slice %15 {offsets = [0, 2], sizes = [16, 2], strides = [1, 1]} : vector<16x4xf32> to vector<16x2xf32>
    %cst_21 = arith.constant 0.000000e+00 : f32
    %36 = vector.broadcast %cst_21 : f32 to vector<16x2xf32>
    %37 = arith.maximumf %35, %36 : vector<16x2xf32>
    %c0_22 = arith.constant 0 : index
    %c0_23 = arith.constant 0 : index
    %c0_24 = arith.constant 0 : index
    %38 = vector.load %arg4[%c0_22, %c0_23, %c0_24] : memref<4x2x32xf32, #tpu.memory_space<vmem>>, vector<1x2x32xf32>
    %39 = vector.shape_cast %38 : vector<1x2x32xf32> to vector<2x32xf32>
    %40 = vector.extract_strided_slice %24 {offsets = [0, 0], sizes = [16, 1], strides = [1, 1]} : vector<16x2xf32> to vector<16x1xf32>
    %41 = vector.extract_strided_slice %39 {offsets = [0, 0], sizes = [1, 32], strides = [1, 1]} : vector<2x32xf32> to vector<1x32xf32>
    %42 = vector.broadcast %40 : vector<16x1xf32> to vector<16x32xf32>
    %43 = vector.broadcast %41 : vector<1x32xf32> to vector<16x32xf32>
    %44 = arith.mulf %42, %43 : vector<16x32xf32>
    %45 = vector.extract_strided_slice %24 {offsets = [0, 1], sizes = [16, 1], strides = [1, 1]} : vector<16x2xf32> to vector<16x1xf32>
    %46 = vector.extract_strided_slice %39 {offsets = [1, 0], sizes = [1, 32], strides = [1, 1]} : vector<2x32xf32> to vector<1x32xf32>
    %47 = vector.broadcast %45 : vector<16x1xf32> to vector<16x32xf32>
    %48 = vector.broadcast %46 : vector<1x32xf32> to vector<16x32xf32>
    %49 = arith.mulf %47, %48 : vector<16x32xf32>
    %50 = arith.addf %44, %49 : vector<16x32xf32>
    %51 = arith.negf %50 : vector<16x32xf32>
    %52 = math.exp %51 : vector<16x32xf32>
    %cst_25 = arith.constant 1.000000e+00 : f32
    %53 = vector.broadcast %cst_25 : f32 to vector<16x32xf32>
    %54 = arith.addf %53, %52 : vector<16x32xf32>
    %55 = arith.divf %53, %54 : vector<16x32xf32>
    %c1 = arith.constant 1 : index
    %c0_26 = arith.constant 0 : index
    %c0_27 = arith.constant 0 : index
    %56 = vector.load %arg4[%c1, %c0_26, %c0_27] : memref<4x2x32xf32, #tpu.memory_space<vmem>>, vector<1x2x32xf32>
    %57 = vector.shape_cast %56 : vector<1x2x32xf32> to vector<2x32xf32>
    %58 = vector.extract_strided_slice %31 {offsets = [0, 0], sizes = [16, 1], strides = [1, 1]} : vector<16x2xf32> to vector<16x1xf32>
    %59 = vector.extract_strided_slice %57 {offsets = [0, 0], sizes = [1, 32], strides = [1, 1]} : vector<2x32xf32> to vector<1x32xf32>
    %60 = vector.broadcast %58 : vector<16x1xf32> to vector<16x32xf32>
    %61 = vector.broadcast %59 : vector<1x32xf32> to vector<16x32xf32>
    %62 = arith.mulf %60, %61 : vector<16x32xf32>
    %63 = vector.extract_strided_slice %31 {offsets = [0, 1], sizes = [16, 1], strides = [1, 1]} : vector<16x2xf32> to vector<16x1xf32>
    %64 = vector.extract_strided_slice %57 {offsets = [1, 0], sizes = [1, 32], strides = [1, 1]} : vector<2x32xf32> to vector<1x32xf32>
    %65 = vector.broadcast %63 : vector<16x1xf32> to vector<16x32xf32>
    %66 = vector.broadcast %64 : vector<1x32xf32> to vector<16x32xf32>
    %67 = arith.mulf %65, %66 : vector<16x32xf32>
    %68 = arith.addf %62, %67 : vector<16x32xf32>
    %69 = arith.negf %68 : vector<16x32xf32>
    %70 = math.exp %69 : vector<16x32xf32>
    %cst_28 = arith.constant 1.000000e+00 : f32
    %71 = vector.broadcast %cst_28 : f32 to vector<16x32xf32>
    %72 = arith.addf %71, %70 : vector<16x32xf32>
    %73 = arith.divf %71, %72 : vector<16x32xf32>
    %c2 = arith.constant 2 : index
    %c0_29 = arith.constant 0 : index
    %c0_30 = arith.constant 0 : index
    %74 = vector.load %arg4[%c2, %c0_29, %c0_30] : memref<4x2x32xf32, #tpu.memory_space<vmem>>, vector<1x2x32xf32>
    %75 = vector.shape_cast %74 : vector<1x2x32xf32> to vector<2x32xf32>
    %76 = vector.extract_strided_slice %34 {offsets = [0, 0], sizes = [16, 1], strides = [1, 1]} : vector<16x2xf32> to vector<16x1xf32>
    %77 = vector.extract_strided_slice %75 {offsets = [0, 0], sizes = [1, 32], strides = [1, 1]} : vector<2x32xf32> to vector<1x32xf32>
    %78 = vector.broadcast %76 : vector<16x1xf32> to vector<16x32xf32>
    %79 = vector.broadcast %77 : vector<1x32xf32> to vector<16x32xf32>
    %80 = arith.mulf %78, %79 : vector<16x32xf32>
    %81 = vector.extract_strided_slice %34 {offsets = [0, 1], sizes = [16, 1], strides = [1, 1]} : vector<16x2xf32> to vector<16x1xf32>
    %82 = vector.extract_strided_slice %75 {offsets = [1, 0], sizes = [1, 32], strides = [1, 1]} : vector<2x32xf32> to vector<1x32xf32>
    %83 = vector.broadcast %81 : vector<16x1xf32> to vector<16x32xf32>
    %84 = vector.broadcast %82 : vector<1x32xf32> to vector<16x32xf32>
    %85 = arith.mulf %83, %84 : vector<16x32xf32>
    %86 = arith.addf %80, %85 : vector<16x32xf32>
    %87 = arith.negf %86 : vector<16x32xf32>
    %88 = math.exp %87 : vector<16x32xf32>
    %cst_31 = arith.constant 1.000000e+00 : f32
    %89 = vector.broadcast %cst_31 : f32 to vector<16x32xf32>
    %90 = arith.addf %89, %88 : vector<16x32xf32>
    %91 = arith.divf %89, %90 : vector<16x32xf32>
    %c3 = arith.constant 3 : index
    %c0_32 = arith.constant 0 : index
    %c0_33 = arith.constant 0 : index
    %92 = vector.load %arg4[%c3, %c0_32, %c0_33] : memref<4x2x32xf32, #tpu.memory_space<vmem>>, vector<1x2x32xf32>
    %93 = vector.shape_cast %92 : vector<1x2x32xf32> to vector<2x32xf32>
    %94 = vector.extract_strided_slice %37 {offsets = [0, 0], sizes = [16, 1], strides = [1, 1]} : vector<16x2xf32> to vector<16x1xf32>
    %95 = vector.extract_strided_slice %93 {offsets = [0, 0], sizes = [1, 32], strides = [1, 1]} : vector<2x32xf32> to vector<1x32xf32>
    %96 = vector.broadcast %94 : vector<16x1xf32> to vector<16x32xf32>
    %97 = vector.broadcast %95 : vector<1x32xf32> to vector<16x32xf32>
    %98 = arith.mulf %96, %97 : vector<16x32xf32>
    %99 = vector.extract_strided_slice %37 {offsets = [0, 1], sizes = [16, 1], strides = [1, 1]} : vector<16x2xf32> to vector<16x1xf32>
    %100 = vector.extract_strided_slice %93 {offsets = [1, 0], sizes = [1, 32], strides = [1, 1]} : vector<2x32xf32> to vector<1x32xf32>
    %101 = vector.broadcast %99 : vector<16x1xf32> to vector<16x32xf32>
    %102 = vector.broadcast %100 : vector<1x32xf32> to vector<16x32xf32>
    %103 = arith.mulf %101, %102 : vector<16x32xf32>
    %104 = arith.addf %98, %103 : vector<16x32xf32>
    %105 = arith.negf %104 : vector<16x32xf32>
    %106 = math.exp %105 : vector<16x32xf32>
    %cst_34 = arith.constant 1.000000e+00 : f32
    %107 = vector.broadcast %cst_34 : f32 to vector<16x32xf32>
    %108 = arith.addf %107, %106 : vector<16x32xf32>
    %109 = arith.divf %107, %108 : vector<16x32xf32>
    %110 = vector.shape_cast %3 : vector<256x32xf32> to vector<16x16x32xf32>
    %111 = vector.shape_cast %55 : vector<16x32xf32> to vector<16x1x32xf32>
    %112 = vector.shape_cast %73 : vector<16x32xf32> to vector<1x16x32xf32>
    %113 = vector.broadcast %111 : vector<16x1x32xf32> to vector<16x16x32xf32>
    %114 = vector.broadcast %112 : vector<1x16x32xf32> to vector<16x16x32xf32>
    %115 = arith.mulf %113, %114 : vector<16x16x32xf32>
    %116 = vector.shape_cast %91 : vector<16x32xf32> to vector<16x1x32xf32>
    %117 = vector.shape_cast %109 : vector<16x32xf32> to vector<1x16x32xf32>
    %118 = vector.broadcast %116 : vector<16x1x32xf32> to vector<16x16x32xf32>
    %119 = vector.broadcast %117 : vector<1x16x32xf32> to vector<16x16x32xf32>
    %120 = arith.mulf %118, %119 : vector<16x16x32xf32>
    %121 = arith.addf %115, %120 : vector<16x16x32xf32>
    %122 = arith.mulf %110, %121 : vector<16x16x32xf32>
    %123 = arith.truncf %122 : vector<16x16x32xf32> to vector<16x16x32xbf16>
    %c0_35 = arith.constant 0 : index
    %c0_36 = arith.constant 0 : index
    %c0_37 = arith.constant 0 : index
    %c0_38 = arith.constant 0 : index
    %124 = vector.load %arg7[%c0_35, %c0_36, %c0_37, %c0_38] : memref<1x16x16x32xbf16, #tpu.memory_space<vmem>>, vector<1x16x16x32xbf16>
    %125 = vector.shape_cast %124 : vector<1x16x16x32xbf16> to vector<16x16x32xbf16>
    %126 = vector.shape_cast %123 : vector<16x16x32xbf16> to vector<1x16x16x32xbf16>
    tpu.vector_store %arg7[%c0_35, %c0_36, %c0_37, %c0_38], %126 {strides = array<i32>} : memref<1x16x16x32xbf16, #tpu.memory_space<vmem>>, vector<1x16x16x32xbf16>,
    return
  }
  func.func @transform_0(%arg0: i32) -> (i32, i32, i32) {
    %c0_i32 = arith.constant 0 : i32
    %c0_i32_0 = arith.constant 0 : i32
    %c0_i32_1 = arith.constant 0 : i32
    return %arg0, %c0_i32, %c0_i32_0 : i32, i32, i32
  }
  func.func @transform_1(%arg0: i32) -> (i32, i32) {
    %c0_i32 = arith.constant 0 : i32
    %c0_i32_0 = arith.constant 0 : i32
    %c0_i32_1 = arith.constant 0 : i32
    return %c0_i32, %c0_i32_0 : i32, i32
  }
  func.func @transform_2(%arg0: i32) -> (i32, i32) {
    %c0_i32 = arith.constant 0 : i32
    %c0_i32_0 = arith.constant 0 : i32
    %c0_i32_1 = arith.constant 0 : i32
    return %c0_i32, %c0_i32_0 : i32, i32
  }
  func.func @transform_3(%arg0: i32) -> (i32, i32, i32) {
    %c0_i32 = arith.constant 0 : i32
    %c0_i32_0 = arith.constant 0 : i32
    %c0_i32_1 = arith.constant 0 : i32
    %c0_i32_2 = arith.constant 0 : i32
    return %c0_i32, %c0_i32_0, %c0_i32_1 : i32, i32, i32
  }
  func.func @transform_4(%arg0: i32) -> (i32, i32) {
    %c0_i32 = arith.constant 0 : i32
    %c0_i32_0 = arith.constant 0 : i32
    %c0_i32_1 = arith.constant 0 : i32
    return %c0_i32, %c0_i32_0 : i32, i32
  }
  func.func @transform_5(%arg0: i32) -> (i32, i32) {
    %c0_i32 = arith.constant 0 : i32
    %c0_i32_0 = arith.constant 0 : i32
    %c0_i32_1 = arith.constant 0 : i32
    return %c0_i32, %c0_i32_0 : i32, i32
  }
  func.func @transform_6(%arg0: i32) -> (i32, i32, i32, i32) {
    %c0_i32 = arith.constant 0 : i32
    %c0_i32_0 = arith.constant 0 : i32
    %c0_i32_1 = arith.constant 0 : i32
    %c0_i32_2 = arith.constant 0 : i32
    return %arg0, %c0_i32, %c0_i32_0, %c0_i32_1 : i32, i32, i32, i32
  }
}

</mosaic_0001>

<llo_original>
// kernel: tpu_custom_call.1
$region0: #{tpu_custom_call.1}
  #allocation0 [shape = 'u32[]', space=smem, size = 0x4, offset = 0x4, fixed_abs, tag = 'smem constant byte address 0x4 - core index']
  #allocation1 [shape = 'u32[144,128]{1,0:T(1,128)}', space=vmem, size = 0x12000, scoped, tag = 'internal scratch']
  %s0 = inlined_call_operand.vmem [shape: bf16[2,256,64], index: 0, kind: input, shape index: {}]
  %s1 = inlined_call_operand.vmem [shape: bf16[64,32], index: 1, kind: input, shape index: {}]
  %s2 = inlined_call_operand.vmem [shape: f32[64,4], index: 2, kind: input, shape index: {}]
  %s3 = inlined_call_operand.vmem [shape: f32[4,2,32], index: 3, kind: input, shape index: {}]
  %s4 = inlined_call_operand.vmem [shape: f32[1,2], index: 4, kind: input, shape index: {}]
  %s5 = inlined_call_operand.vmem [shape: f32[1,2], index: 5, kind: input, shape index: {}]
  %s6 = inlined_call_operand.hbm [shape: bf16[2,16,16,32], index: 6, kind: output, shape index: {}]
  %s7 = sld [smem:[#allocation0]]
  $region57: #{tpu_custom_call.1} parent=0
    _
  %s9 = ssub.s32 1, %s7
  %s10 = scalar_select 0, %s9, %s7
  $region1: #{tpu_custom_call.1} parent=0
    #allocation2 [shape = 'u8[131072]{0}', space=vmem, size = 0x20000, scoped, tag = 'output window, operand 0']
    #allocation3 [shape = 's32[2]{0}', space=sflag, size = 0x8, scoped, tag = 'scoped memory for tpu_custom_call.1']
    %11 = vsyncpa [#allocation3], 0
    %s12 = scalar_lea.sflag [#allocation3], 1
    %13 = vsyncpa %s12, 0
    loop: start=0, step=1, limit=4
    $region2: #{tpu_custom_call.1} parent=1 // loop_pre_header
      _
    $region3: #{tpu_custom_call.1} parent=1 // loop_header
      %s15 = sphi 0, %s19
      %p16 = scmp.ge.s32.totalorder %s15, 4
      %s25 = sphi 0, %s27
      %s28 = sphi 0, %s25
      %s29 = sphi 0, %s28
      %s45 = sphi 0, %s29
      %s49 = sphi 0, %s49
      %s51 = sphi 0, %s49
      %s52 = sphi 0, %s51
      %s66 = sphi 0, %s52
      %s70 = sphi 0, %s70
      %s72 = sphi 0, %s70
      %s73 = sphi 0, %s72
      %s87 = sphi 0, %s73
      %s91 = sphi 0, %s91
      %s93 = sphi 0, %s91
      %s94 = sphi 0, %s93
      %s108 = sphi 0, %s94
      %s112 = sphi 0, %s112
      %s114 = sphi 0, %s112
      %s115 = sphi 0, %s114
      %s129 = sphi 0, %s115
      %s133 = sphi 0, %s133
      %s135 = sphi 0, %s133
      %s136 = sphi 0, %s135
      %s150 = sphi 0, %s136
      %s156 = sphi 0, %s158
      %s159 = sphi 0, %s156
      %s160 = sphi 0, %s159
      %s176 = sphi 0, %s160
    $region4: #{tpu_custom_call.1} parent=1 // loop_header_branch
      %18 = sbr.rel (%p16) target = $region8
    $region5: #{tpu_custom_call.1} parent=1 // loop_body
      %s20 = ssub.s32 %s15, 1
      %s21 = ssub.s32 %s15, 2
      %s22 = sadd.s32 %s15, 1
      %s23 = ssub.s32 %s15, %s22
      %p24 = scmp.eq.s32.totalorder %s23, 0
      %s26 = sadd.s32 %s25, 1
      %s27 = scalar_select %p24, %s25, %s26
      %p30 = pneg %p24
      %p31 = scmp.eq.s32.totalorder %s15, 1
      %p32 = por %p30, %p31
      %p33 = scmp.ne.s32.totalorder %s25, %s28
      %p34 = scmp.eq.s32.totalorder %s15, 0
      %p35 = por %p33, %p34
      %p36 = scmp.ne.s32.totalorder %s25, %s28
      %p37 = scmp.eq.s32.totalorder %s20, 1
      %p38 = por %p36, %p37
      %p39 = scmp.ne.s32.totalorder %s28, %s29
      %p40 = scmp.eq.s32.totalorder %s20, 0
      %p41 = por %p39, %p40
      %p42 = scmp.ne.s32.totalorder %s28, %s29
      %p43 = scmp.eq.s32.totalorder %s21, 1
      %p44 = por %p42, %p43
      %p46 = scmp.ne.s32.totalorder %s29, %s45
      %p47 = scmp.eq.s32.totalorder %s21, 0
      %p48 = por %p46, %p47
      %s50 = sadd.s32 %s49, 1
      %p53 = scmp.eq.s32.totalorder %s15, 1
      %p54 = scmp.ne.s32.totalorder %s49, %s51
      %p55 = scmp.eq.s32.totalorder %s15, 0
      %p56 = por %p54, %p55
      %p57 = scmp.ne.s32.totalorder %s49, %s51
      %p58 = scmp.eq.s32.totalorder %s20, 1
      %p59 = por %p57, %p58
      %p60 = scmp.ne.s32.totalorder %s51, %s52
      %p61 = scmp.eq.s32.totalorder %s20, 0
      %p62 = por %p60, %p61
      %p63 = scmp.ne.s32.totalorder %s51, %s52
      %p64 = scmp.eq.s32.totalorder %s21, 1
      %p65 = por %p63, %p64
      %p67 = scmp.ne.s32.totalorder %s52, %s66
      %p68 = scmp.eq.s32.totalorder %s21, 0
      %p69 = por %p67, %p68
      %s71 = sadd.s32 %s70, 1
      %p74 = scmp.eq.s32.totalorder %s15, 1
      %p75 = scmp.ne.s32.totalorder %s70, %s72
      %p76 = scmp.eq.s32.totalorder %s15, 0
      %p77 = por %p75, %p76
      %p78 = scmp.ne.s32.totalorder %s70, %s72
      %p79 = scmp.eq.s32.totalorder %s20, 1
      %p80 = por %p78, %p79
      %p81 = scmp.ne.s32.totalorder %s72, %s73
      %p82 = scmp.eq.s32.totalorder %s20, 0
      %p83 = por %p81, %p82
      %p84 = scmp.ne.s32.totalorder %s72, %s73
      %p85 = scmp.eq.s32.totalorder %s21, 1
      %p86 = por %p84, %p85
      %p88 = scmp.ne.s32.totalorder %s73, %s87
      %p89 = scmp.eq.s32.totalorder %s21, 0
      %p90 = por %p88, %p89
      %s92 = sadd.s32 %s91, 1
      %p95 = scmp.eq.s32.totalorder %s15, 1
      %p96 = scmp.ne.s32.totalorder %s91, %s93
      %p97 = scmp.eq.s32.totalorder %s15, 0
      %p98 = por %p96, %p97
      %p99 = scmp.ne.s32.totalorder %s91, %s93
      %p100 = scmp.eq.s32.totalorder %s20, 1
      %p101 = por %p99, %p100
      %p102 = scmp.ne.s32.totalorder %s93, %s94
      %p103 = scmp.eq.s32.totalorder %s20, 0
      %p104 = por %p102, %p103
      %p105 = scmp.ne.s32.totalorder %s93, %s94
      %p106 = scmp.eq.s32.totalorder %s21, 1
      %p107 = por %p105, %p106
      %p109 = scmp.ne.s32.totalorder %s94, %s108
      %p110 = scmp.eq.s32.totalorder %s21, 0
      %p111 = por %p109, %p110
      %s113 = sadd.s32 %s112, 1
      %p116 = scmp.eq.s32.totalorder %s15, 1
      %p117 = scmp.ne.s32.totalorder %s112, %s114
      %p118 = scmp.eq.s32.totalorder %s15, 0
      %p119 = por %p117, %p118
      %p120 = scmp.ne.s32.totalorder %s112, %s114
      %p121 = scmp.eq.s32.totalorder %s20, 1
      %p122 = por %p120, %p121
      %p123 = scmp.ne.s32.totalorder %s114, %s115
      %p124 = scmp.eq.s32.totalorder %s20, 0
      %p125 = por %p123, %p124
      %p126 = scmp.ne.s32.totalorder %s114, %s115
      %p127 = scmp.eq.s32.totalorder %s21, 1
      %p128 = por %p126, %p127
      %p130 = scmp.ne.s32.totalorder %s115, %s129
      %p131 = scmp.eq.s32.totalorder %s21, 0
      %p132 = por %p130, %p131
      %s134 = sadd.s32 %s133, 1
      %p137 = scmp.eq.s32.totalorder %s15, 1
      %p138 = scmp.ne.s32.totalorder %s133, %s135
      %p139 = scmp.eq.s32.totalorder %s15, 0
      %p140 = por %p138, %p139
      %p141 = scmp.ne.s32.totalorder %s133, %s135
      %p142 = scmp.eq.s32.totalorder %s20, 1
      %p143 = por %p141, %p142
      %p144 = scmp.ne.s32.totalorder %s135, %s136
      %p145 = scmp.eq.s32.totalorder %s20, 0
      %p146 = por %p144, %p145
      %p147 = scmp.ne.s32.totalorder %s135, %s136
      %p148 = scmp.eq.s32.totalorder %s21, 1
      %p149 = por %p147, %p148
      %p151 = scmp.ne.s32.totalorder %s136, %s150
      %p152 = scmp.eq.s32.totalorder %s21, 0
      %p153 = por %p151, %p152
      %s154 = ssub.s32 %s15, %s22
      %p155 = scmp.eq.s32.totalorder %s154, 0
      %s157 = sadd.s32 %s156, 1
      %s158 = scalar_select %p155, %s156, %s157
      %p161 = pneg %p155
      %p162 = scmp.eq.s32.totalorder %s15, 1
      %p163 = por %p161, %p162
      %p164 = scmp.ne.s32.totalorder %s156, %s159
      %p165 = scmp.eq.s32.totalorder %s15, 0
      %p166 = por %p164, %p165
      %p167 = scmp.ne.s32.totalorder %s156, %s159
      %p168 = scmp.eq.s32.totalorder %s20, 1
      %p169 = por %p167, %p168
      %p170 = scmp.ne.s32.totalorder %s159, %s160
      %p171 = scmp.eq.s32.totalorder %s20, 0
      %p172 = por %p170, %p171
      %p173 = scmp.ne.s32.totalorder %s159, %s160
      %p174 = scmp.eq.s32.totalorder %s21, 1
      %p175 = por %p173, %p174
      %p177 = scmp.ne.s32.totalorder %s160, %s176
      %p178 = scmp.eq.s32.totalorder %s21, 0
      %p179 = por %p177, %p178
      %p180 = scmp.le.s32.totalorder 1, %s15
      %p181 = scmp.lt.s32.totalorder %s15, 3
      %p182 = pnand %p180, %p181
      %p183 = pneg %p182
      // Predicated region
      $region9: #{tpu_custom_call.1} parent=5 // pred_check
        _
      $region10: #{tpu_custom_call.1} parent=5 // pred_check_branch
        %185 = sbr.rel (%p182) target = $region12
      $region11: #{tpu_custom_call.1} parent=5 // pred_region
        %s186 = ssub.s32 %s15, 1
        // Predicated region
        $region13: #{tpu_custom_call.1} parent=11 // pred_check
          %p187 = pneg %p62
        $region14: #{tpu_custom_call.1} parent=11 // pred_check_branch
          %189 = sbr.rel (%p187) target = $region16
        $region15: #{tpu_custom_call.1} parent=11 // pred_region
          _
        $region16: #{tpu_custom_call.1} parent=11 // pred_fallthru
          _
        // Predicated region
        $region17: #{tpu_custom_call.1} parent=11 // pred_check
          %p190 = pneg %p83
        $region18: #{tpu_custom_call.1} parent=11 // pred_check_branch
          %192 = sbr.rel (%p190) target = $region20
        $region19: #{tpu_custom_call.1} parent=11 // pred_region
          _
        $region20: #{tpu_custom_call.1} parent=11 // pred_fallthru
          _
        // Predicated region
        $region21: #{tpu_custom_call.1} parent=11 // pred_check
          %p193 = pneg %p104
        $region22: #{tpu_custom_call.1} parent=11 // pred_check_branch
          %195 = sbr.rel (%p193) target = $region24
        $region23: #{tpu_custom_call.1} parent=11 // pred_region
          _
        $region24: #{tpu_custom_call.1} parent=11 // pred_fallthru
          _
        // Predicated region
        $region25: #{tpu_custom_call.1} parent=11 // pred_check
          %p196 = pneg %p125
        $region26: #{tpu_custom_call.1} parent=11 // pred_check_branch
          %198 = sbr.rel (%p196) target = $region28
        $region27: #{tpu_custom_call.1} parent=11 // pred_region
          _
        $region28: #{tpu_custom_call.1} parent=11 // pred_fallthru
          _
        // Predicated region
        $region29: #{tpu_custom_call.1} parent=11 // pred_check
          %p199 = pneg %p146
        $region30: #{tpu_custom_call.1} parent=11 // pred_check_branch
          %201 = sbr.rel (%p199) target = $region32
        $region31: #{tpu_custom_call.1} parent=11 // pred_region
          _
        $region32: #{tpu_custom_call.1} parent=11 // pred_fallthru
          _
      $region12: #{tpu_custom_call.1} parent=5 // pred_fallthru
        _
      %p202 = scmp.lt.s32.totalorder %s15, 2
      // Predicated region
      $region33: #{tpu_custom_call.1} parent=5 // pred_check
        %p203 = pneg %p202
      $region34: #{tpu_custom_call.1} parent=5 // pred_check_branch
        %205 = sbr.rel (%p203) target = $region36
      $region35: #{tpu_custom_call.1} parent=5 // pred_region
        // Predicated region
        $region37: #{tpu_custom_call.1} parent=35 // pred_check
          %p206 = pneg %p35
        $region38: #{tpu_custom_call.1} parent=35 // pred_check_branch
          %208 = sbr.rel (%p206) target = $region40
        $region39: #{tpu_custom_call.1} parent=35 // pred_region
          %p209 = scmp.lt.s32.totalorder %s15, 1
          %s210 = scalar_select %p209, %s15, 1
          %s211 = smul.addr %s210, 32
          %s212 = smul.addr %s211, 4
          %s213 = scalar_lea.vmem %s0, %s212
        $region40: #{tpu_custom_call.1} parent=35 // pred_fallthru
          _
      $region36: #{tpu_custom_call.1} parent=5 // pred_fallthru
        _
      %p214 = scmp.le.s32.totalorder 1, %s15
      %p215 = scmp.lt.s32.totalorder %s15, 3
      %p216 = pnand %p214, %p215
      %p217 = pneg %p216
      // Predicated region
      $region41: #{tpu_custom_call.1} parent=5 // pred_check
        _
      $region42: #{tpu_custom_call.1} parent=5 // pred_check_branch
        %219 = sbr.rel (%p216) target = $region44
      $region43: #{tpu_custom_call.1} parent=5 // pred_region
        %s220 = ssub.s32 %s15, 1
        %p221 = scmp.lt.s32.totalorder %s20, 1
        %s222 = scalar_select %p221, %s20, 1
        %s223 = smul.addr %s222, 32
        %s224 = smul.addr %s223, 4
        %s225 = scalar_lea.vmem %s0, %s224
        %p226 = pneg %p41
        %p227 = pneg %p38
        %p228 = pneg %p62
        %p229 = pneg %p59
        %p230 = pneg %p83
        %p231 = pneg %p80
        %p232 = pneg %p104
        %p233 = pneg %p101
        %p234 = pneg %p125
        %p235 = pneg %p122
        %p236 = pneg %p146
        %p237 = pneg %p143
        %p238 = pneg %p172
        %p239 = pneg %p169
        %s240 = sand.u32 %s159, 1
        %s241 = scalar_lea.sflag [#allocation3], %s240
        %s242 = sand.u32 %s159, 1
        %s243 = smul.addr %s242, 128
        %s244 = scalar_lea.vmem [#allocation2], %s243
        %p245 = scmp.lt.s32.totalorder %s20, 1
        %s246 = scalar_select %p245, %s20, 1
        %s247 = smul.addr %s246, 32
        %s248 = smul.addr %s247, 4
        %s249 = scalar_lea.vmem %s0, %s248
        %v251 = vld [vmem:[%s249] sm:$0xf]
        %v252 = vld [vmem:[%s249 + $0x4] sm:$0xf]
        %v253 = vld [vmem:[%s249 + $0x8] sm:$0xf]
        %v254 = vld [vmem:[%s249 + $0xc] sm:$0xf]
        %v255 = vld [vmem:[%s249 + $0x10] sm:$0xf]
        %v256 = vld [vmem:[%s249 + $0x14] sm:$0xf]
        %v257 = vld [vmem:[%s249 + $0x18] sm:$0xf]
        %v258 = vld [vmem:[%s249 + $0x1c] sm:$0xf]
        %v259 = vld [vmem:[%s249 + $0x20] sm:$0xf]
        %v260 = vld [vmem:[%s249 + $0x24] sm:$0xf]
        %v261 = vld [vmem:[%s249 + $0x28] sm:$0xf]
        %v262 = vld [vmem:[%s249 + $0x2c] sm:$0xf]
        %v263 = vld [vmem:[%s249 + $0x30] sm:$0xf]
        %v264 = vld [vmem:[%s249 + $0x34] sm:$0xf]
        %v265 = vld [vmem:[%s249 + $0x38] sm:$0xf]
        %v266 = vld [vmem:[%s249 + $0x3c] sm:$0xf]
        %v267 = vld [vmem:[%s249 + $0x40] sm:$0xf]
        %v268 = vld [vmem:[%s249 + $0x44] sm:$0xf]
        %v269 = vld [vmem:[%s249 + $0x48] sm:$0xf]
        %v270 = vld [vmem:[%s249 + $0x4c] sm:$0xf]
        %v271 = vld [vmem:[%s249 + $0x50] sm:$0xf]
        %v272 = vld [vmem:[%s249 + $0x54] sm:$0xf]
        %v273 = vld [vmem:[%s249 + $0x58] sm:$0xf]
        %v274 = vld [vmem:[%s249 + $0x5c] sm:$0xf]
        %v275 = vld [vmem:[%s249 + $0x60] sm:$0xf]
        %v276 = vld [vmem:[%s249 + $0x64] sm:$0xf]
        %v277 = vld [vmem:[%s249 + $0x68] sm:$0xf]
        %v278 = vld [vmem:[%s249 + $0x6c] sm:$0xf]
        %v279 = vld [vmem:[%s249 + $0x70] sm:$0xf]
        %v280 = vld [vmem:[%s249 + $0x74] sm:$0xf]
        %v281 = vld [vmem:[%s249 + $0x78] sm:$0xf]
        %v282 = vld [vmem:[%s249 + $0x7c] sm:$0xf]
        %v283 = vld [vmem:[%s1] sm:$0xf]
        %v284 = vld [vmem:[%s1 + $0x4] sm:$0xf]
        %v285 = vld [vmem:[%s1 + $0x8] sm:$0xf]
        %v286 = vld [vmem:[%s1 + $0xc] sm:$0xf]
        %v287 = vld [vmem:[%s1 + $0x10] sm:$0xf]
        %v288 = vld [vmem:[%s1 + $0x14] sm:$0xf]
        %v289 = vld [vmem:[%s1 + $0x18] sm:$0xf]
        %v290 = vld [vmem:[%s1 + $0x1c] sm:$0xf]
        %v323 = vunpack.c.l.b16 %v251
        %v324 = vunpack.c.l.b16 %v252
        %v325 = vunpack.c.l.b16 %v253
        %v326 = vunpack.c.l.b16 %v254
        %v327 = vunpack.c.l.b16 %v255
        %v328 = vunpack.c.l.b16 %v256
        %v329 = vunpack.c.l.b16 %v257
        %v330 = vunpack.c.l.b16 %v258
        %v331 = vunpack.c.l.b16 %v259
        %v332 = vunpack.c.l.b16 %v260
        %v333 = vunpack.c.l.b16 %v261
        %v334 = vunpack.c.l.b16 %v262
        %v335 = vunpack.c.l.b16 %v263
        %v336 = vunpack.c.l.b16 %v264
        %v337 = vunpack.c.l.b16 %v265
        %v338 = vunpack.c.l.b16 %v266
        %v339 = vunpack.c.l.b16 %v267
        %v340 = vunpack.c.l.b16 %v268
        %v341 = vunpack.c.l.b16 %v269
        %v342 = vunpack.c.l.b16 %v270
        %v343 = vunpack.c.l.b16 %v271
        %v344 = vunpack.c.l.b16 %v272
        %v345 = vunpack.c.l.b16 %v273
        %v346 = vunpack.c.l.b16 %v274
        %v347 = vunpack.c.l.b16 %v275
        %v348 = vunpack.c.l.b16 %v276
        %v349 = vunpack.c.l.b16 %v277
        %v350 = vunpack.c.l.b16 %v278
        %v351 = vunpack.c.l.b16 %v279
        %v352 = vunpack.c.l.b16 %v280
        %v353 = vunpack.c.l.b16 %v281
        %v354 = vunpack.c.l.b16 %v282
        %v355 = vpack.c.b16 %v324, %v323
        %v356 = vpack.c.b16 %v326, %v325
        %v357 = vpack.c.b16 %v328, %v327
        %v358 = vpack.c.b16 %v330, %v329
        %v359 = vpack.c.b16 %v332, %v331
        %v360 = vpack.c.b16 %v334, %v333
        %v361 = vpack.c.b16 %v336, %v335
        %v362 = vpack.c.b16 %v338, %v337
        %v363 = vpack.c.b16 %v340, %v339
        %v364 = vpack.c.b16 %v342, %v341
        %v365 = vpack.c.b16 %v344, %v343
        %v366 = vpack.c.b16 %v346, %v345
        %v367 = vpack.c.b16 %v348, %v347
        %v368 = vpack.c.b16 %v350, %v349
        %v369 = vpack.c.b16 %v352, %v351
        %v370 = vpack.c.b16 %v354, %v353
        %v379 = vunpack.c.l.b16 %v283
        %v380 = vunpack.c.l.b16 %v284
        %v381 = vunpack.c.l.b16 %v285
        %v382 = vunpack.c.l.b16 %v286
        %v383 = vunpack.c.l.b16 %v287
        %v384 = vunpack.c.l.b16 %v288
        %v385 = vunpack.c.l.b16 %v289
        %v386 = vunpack.c.l.b16 %v290
        %v387 = vpack.c.b16 %v380, %v379
        %v388 = vpack.c.b16 %v382, %v381
        %v389 = vpack.c.b16 %v384, %v383
        %v390 = vpack.c.b16 %v386, %v385
        %vm395 = vcmask 523264
        %v397 = vsel %vm395, %v355, 0
        %v400 = vsel %vm395, %v356, 0
        %v403 = vsel %vm395, %v357, 0
        %v406 = vsel %vm395, %v358, 0
        %v409 = vsel %vm395, %v359, 0
        %v412 = vsel %vm395, %v360, 0
        %v415 = vsel %vm395, %v361, 0
        %v418 = vsel %vm395, %v362, 0
        %v421 = vsel %vm395, %v363, 0
        %v424 = vsel %vm395, %v364, 0
        %v427 = vsel %vm395, %v365, 0
        %v430 = vsel %vm395, %v366, 0
        %v433 = vsel %vm395, %v367, 0
        %v436 = vsel %vm395, %v368, 0
        %v439 = vsel %vm395, %v369, 0
        %v442 = vsel %vm395, %v370, 0
        %444 = vmatprep.subr.bf16.mxu0 0
        %445 = vmatpush1.bf16.msra.mxu0 %v387
        %446 = vmatprep.subr.bf16.mxu0 0
        %447 = vmatpush1.bf16.msra.mxu0 %v388
        %448 = vmatprep.subr.bf16.mxu0 0
        %449 = vmatpush1.bf16.msra.mxu0 %v389
        %450 = vmatprep.subr.bf16.mxu0 0
        %451 = vmatpush1.bf16.msra.mxu0 %v390
        %452 = vmatprep.subr.bf16.mxu0 0
        %453 = vmatpush1.bf16.msra.mxu0 0
        %454 = vmatprep.subr.bf16.mxu0 0
        %455 = vmatpush1.bf16.msra.mxu0 0
        %456 = vmatprep.subr.bf16.mxu0 0
        %457 = vmatpush1.bf16.msra.mxu0 0
        %458 = vmatprep.subr.bf16.mxu0 0
        %459 = vmatpush1.bf16.msra.mxu0 0
        %460 = vmatprep.subr.bf16.mxu0 0
        %461 = vmatpush1.bf16.msra.mxu0 0
        %462 = vmatprep.subr.bf16.mxu0 0
        %463 = vmatpush1.bf16.msra.mxu0 0
        %464 = vmatprep.subr.bf16.mxu0 0
        %465 = vmatpush1.bf16.msra.mxu0 0
        %466 = vmatprep.subr.bf16.mxu0 0
        %467 = vmatpush1.bf16.msra.mxu0 0
        %468 = vmatprep.subr.bf16.mxu0 0
        %469 = vmatpush1.bf16.msra.mxu0 0
        %470 = vmatprep.subr.bf16.mxu0 0
        %471 = vmatpush1.bf16.msra.mxu0 0
        %472 = vmatprep.subr.bf16.mxu0 0
        %473 = vmatpush1.bf16.msra.mxu0 0
        %474 = vmatprep.subr.bf16.mxu0 0
        %475 = vmatpush1.bf16.msra.mxu0 0
        %476 = vmatprep.mubr.bf16.mxu0 0
        %477 = vmatmul.mubr.bf16.gmra.mrb[0].mxu0 %v397
        %v478 = vpop.f32.mrb[0].mxu0
        %v479 = vadd.f32 0.0, %v478
        %v480 = vpop.f32.mrb[0].mxu0
        %v481 = vpop.f32.mrb[0].mxu0
        %v482 = vadd.f32 0.0, %v481
        %v483 = vpop.f32.mrb[0].mxu0
        %484 = vmatprep.mubr.bf16.mxu0 0
        %485 = vmatmul.mubr.bf16.gmra.mrb[0].mxu0 %v400
        %v486 = vpop.f32.mrb[0].mxu0
        %v487 = vadd.f32 0.0, %v486
        %v488 = vpop.f32.mrb[0].mxu0
        %v489 = vpop.f32.mrb[0].mxu0
        %v490 = vadd.f32 0.0, %v489
        %v491 = vpop.f32.mrb[0].mxu0
        %492 = vmatprep.mubr.bf16.mxu0 0
        %493 = vmatmul.mubr.bf16.gmra.mrb[0].mxu0 %v403
        %v494 = vpop.f32.mrb[0].mxu0
        %v495 = vadd.f32 0.0, %v494
        %v496 = vpop.f32.mrb[0].mxu0
        %v497 = vpop.f32.mrb[0].mxu0
        %v498 = vadd.f32 0.0, %v497
        %v499 = vpop.f32.mrb[0].mxu0
        %500 = vmatprep.mubr.bf16.mxu0 0
        %501 = vmatmul.mubr.bf16.gmra.mrb[0].mxu0 %v406
        %v502 = vpop.f32.mrb[0].mxu0
        %v503 = vadd.f32 0.0, %v502
        %v504 = vpop.f32.mrb[0].mxu0
        %v505 = vpop.f32.mrb[0].mxu0
        %v506 = vadd.f32 0.0, %v505
        %v507 = vpop.f32.mrb[0].mxu0
        %508 = vmatprep.mubr.bf16.mxu0 0
        %509 = vmatmul.mubr.bf16.gmra.mrb[0].mxu0 %v409
        %v510 = vpop.f32.mrb[0].mxu0
        %v511 = vadd.f32 0.0, %v510
        %v512 = vpop.f32.mrb[0].mxu0
        %v513 = vpop.f32.mrb[0].mxu0
        %v514 = vadd.f32 0.0, %v513
        %v515 = vpop.f32.mrb[0].mxu0
        %516 = vmatprep.mubr.bf16.mxu0 0
        %517 = vmatmul.mubr.bf16.gmra.mrb[0].mxu0 %v412
        %v518 = vpop.f32.mrb[0].mxu0
        %v519 = vadd.f32 0.0, %v518
        %v520 = vpop.f32.mrb[0].mxu0
        %v521 = vpop.f32.mrb[0].mxu0
        %v522 = vadd.f32 0.0, %v521
        %v523 = vpop.f32.mrb[0].mxu0
        %524 = vmatprep.mubr.bf16.mxu0 0
        %525 = vmatmul.mubr.bf16.gmra.mrb[0].mxu0 %v415
        %v526 = vpop.f32.mrb[0].mxu0
        %v527 = vadd.f32 0.0, %v526
        %v528 = vpop.f32.mrb[0].mxu0
        %v529 = vpop.f32.mrb[0].mxu0
        %v530 = vadd.f32 0.0, %v529
        %v531 = vpop.f32.mrb[0].mxu0
        %532 = vmatprep.mubr.bf16.mxu0 0
        %533 = vmatmul.mubr.bf16.gmra.mrb[0].mxu0 %v418
        %v534 = vpop.f32.mrb[0].mxu0
        %v535 = vadd.f32 0.0, %v534
        %v536 = vpop.f32.mrb[0].mxu0
        %v537 = vpop.f32.mrb[0].mxu0
        %v538 = vadd.f32 0.0, %v537
        %v539 = vpop.f32.mrb[0].mxu0
        %540 = vmatprep.mubr.bf16.mxu0 0
        %541 = vmatmul.mubr.bf16.gmra.mrb[0].mxu0 %v421
        %v542 = vpop.f32.mrb[0].mxu0
        %v543 = vadd.f32 0.0, %v542
        %v544 = vpop.f32.mrb[0].mxu0
        %v545 = vpop.f32.mrb[0].mxu0
        %v546 = vadd.f32 0.0, %v545
        %v547 = vpop.f32.mrb[0].mxu0
        %548 = vmatprep.mubr.bf16.mxu0 0
        %549 = vmatmul.mubr.bf16.gmra.mrb[0].mxu0 %v424
        %v550 = vpop.f32.mrb[0].mxu0
        %v551 = vadd.f32 0.0, %v550
        %v552 = vpop.f32.mrb[0].mxu0
        %v553 = vpop.f32.mrb[0].mxu0
        %v554 = vadd.f32 0.0, %v553
        %v555 = vpop.f32.mrb[0].mxu0
        %556 = vmatprep.mubr.bf16.mxu0 0
        %557 = vmatmul.mubr.bf16.gmra.mrb[0].mxu0 %v427
        %v558 = vpop.f32.mrb[0].mxu0
        %v559 = vadd.f32 0.0, %v558
        %v560 = vpop.f32.mrb[0].mxu0
        %v561 = vpop.f32.mrb[0].mxu0
        %v562 = vadd.f32 0.0, %v561
        %v563 = vpop.f32.mrb[0].mxu0
        %564 = vmatprep.mubr.bf16.mxu0 0
        %565 = vmatmul.mubr.bf16.gmra.mrb[0].mxu0 %v430
        %v566 = vpop.f32.mrb[0].mxu0
        %v567 = vadd.f32 0.0, %v566
        %v568 = vpop.f32.mrb[0].mxu0
        %v569 = vpop.f32.mrb[0].mxu0
        %v570 = vadd.f32 0.0, %v569
        %v571 = vpop.f32.mrb[0].mxu0
        %572 = vmatprep.mubr.bf16.mxu0 0
        %573 = vmatmul.mubr.bf16.gmra.mrb[0].mxu0 %v433
        %v574 = vpop.f32.mrb[0].mxu0
        %v575 = vadd.f32 0.0, %v574
        %v576 = vpop.f32.mrb[0].mxu0
        %v577 = vpop.f32.mrb[0].mxu0
        %v578 = vadd.f32 0.0, %v577
        %v579 = vpop.f32.mrb[0].mxu0
        %580 = vmatprep.mubr.bf16.mxu0 0
        %581 = vmatmul.mubr.bf16.gmra.mrb[0].mxu0 %v436
        %v582 = vpop.f32.mrb[0].mxu0
        %v583 = vadd.f32 0.0, %v582
        %v584 = vpop.f32.mrb[0].mxu0
        %v585 = vpop.f32.mrb[0].mxu0
        %v586 = vadd.f32 0.0, %v585
        %v587 = vpop.f32.mrb[0].mxu0
        %588 = vmatprep.mubr.bf16.mxu0 0
        %589 = vmatmul.mubr.bf16.gmra.mrb[0].mxu0 %v439
        %v590 = vpop.f32.mrb[0].mxu0
        %v591 = vadd.f32 0.0, %v590
        %v592 = vpop.f32.mrb[0].mxu0
        %v593 = vpop.f32.mrb[0].mxu0
        %v594 = vadd.f32 0.0, %v593
        %v595 = vpop.f32.mrb[0].mxu0
        %596 = vmatprep.mubr.bf16.mxu0 0
        %597 = vmatmul.mubr.bf16.gmra.mrb[0].mxu0 %v442
        %v598 = vpop.f32.mrb[0].mxu0
        %v599 = vadd.f32 0.0, %v598
        %v600 = vpop.f32.mrb[0].mxu0
        %v601 = vpop.f32.mrb[0].mxu0
        %v602 = vadd.f32 0.0, %v601
        %v603 = vpop.f32.mrb[0].mxu0
        %604 = vdwg.mxu0
        %v605 = vunpack.c.l.bf16 %v251
        %v606 = vunpack.c.l.bf16 %v252
        %v607 = vunpack.c.l.bf16 %v253
        %v608 = vunpack.c.l.bf16 %v254
        %v609 = vunpack.c.l.bf16 %v255
        %v610 = vunpack.c.l.bf16 %v256
        %v611 = vunpack.c.l.bf16 %v257
        %v612 = vunpack.c.l.bf16 %v258
        %v613 = vunpack.c.l.bf16 %v259
        %v614 = vunpack.c.l.bf16 %v260
        %v615 = vunpack.c.l.bf16 %v261
        %v616 = vunpack.c.l.bf16 %v262
        %v617 = vunpack.c.l.bf16 %v263
        %v618 = vunpack.c.l.bf16 %v264
        %v619 = vunpack.c.l.bf16 %v265
        %v620 = vunpack.c.l.bf16 %v266
        %v621 = vunpack.c.l.bf16 %v267
        %v622 = vunpack.c.l.bf16 %v268
        %v623 = vunpack.c.l.bf16 %v269
        %v624 = vunpack.c.l.bf16 %v270
        %v625 = vunpack.c.l.bf16 %v271
        %v626 = vunpack.c.l.bf16 %v272
        %v627 = vunpack.c.l.bf16 %v273
        %v628 = vunpack.c.l.bf16 %v274
        %v629 = vunpack.c.l.bf16 %v275
        %v630 = vunpack.c.l.bf16 %v276
        %v631 = vunpack.c.l.bf16 %v277
        %v632 = vunpack.c.l.bf16 %v278
        %v633 = vunpack.c.l.bf16 %v279
        %v634 = vunpack.c.l.bf16 %v280
        %v635 = vunpack.c.l.bf16 %v281
        %v636 = vunpack.c.l.bf16 %v282
        %v637 = vsel %vm395, %v605, 0.0
        %v638 = vsel %vm395, %v606, 0.0
        %v639 = vadd.f32 %v637, %v638
        %v640 = vrot.slane %v639, 4
        %v641 = vadd.f32 %v639, %v640
        %v642 = vrot.slane %v641, 2
        %v643 = vadd.f32 %v641, %v642
        %v644 = vrot.slane %v643, 1
        %v645 = vadd.f32 %v643, %v644
        %v646 = vsel %vm395, %v607, 0.0
        %v647 = vsel %vm395, %v608, 0.0
        %v648 = vadd.f32 %v646, %v647
        %v649 = vrot.slane %v648, 4
        %v650 = vadd.f32 %v648, %v649
        %v651 = vrot.slane %v650, 2
        %v652 = vadd.f32 %v650, %v651
        %v653 = vrot.slane %v652, 1
        %v654 = vadd.f32 %v652, %v653
        %v655 = vsel %vm395, %v609, 0.0
        %v656 = vsel %vm395, %v610, 0.0
        %v657 = vadd.f32 %v655, %v656
        %v658 = vrot.slane %v657, 4
        %v659 = vadd.f32 %v657, %v658
        %v660 = vrot.slane %v659, 2
        %v661 = vadd.f32 %v659, %v660
        %v662 = vrot.slane %v661, 1
        %v663 = vadd.f32 %v661, %v662
        %v664 = vsel %vm395, %v611, 0.0
        %v665 = vsel %vm395, %v612, 0.0
        %v666 = vadd.f32 %v664, %v665
        %v667 = vrot.slane %v666, 4
        %v668 = vadd.f32 %v666, %v667
        %v669 = vrot.slane %v668, 2
        %v670 = vadd.f32 %v668, %v669
        %v671 = vrot.slane %v670, 1
        %v672 = vadd.f32 %v670, %v671
        %v673 = vsel %vm395, %v613, 0.0
        %v674 = vsel %vm395, %v614, 0.0
        %v675 = vadd.f32 %v673, %v674
        %v676 = vrot.slane %v675, 4
        %v677 = vadd.f32 %v675, %v676
        %v678 = vrot.slane %v677, 2
        %v679 = vadd.f32 %v677, %v678
        %v680 = vrot.slane %v679, 1
        %v681 = vadd.f32 %v679, %v680
        %v682 = vsel %vm395, %v615, 0.0
        %v683 = vsel %vm395, %v616, 0.0
        %v684 = vadd.f32 %v682, %v683
        %v685 = vrot.slane %v684, 4
        %v686 = vadd.f32 %v684, %v685
        %v687 = vrot.slane %v686, 2
        %v688 = vadd.f32 %v686, %v687
        %v689 = vrot.slane %v688, 1
        %v690 = vadd.f32 %v688, %v689
        %v691 = vsel %vm395, %v617, 0.0
        %v692 = vsel %vm395, %v618, 0.0
        %v693 = vadd.f32 %v691, %v692
        %v694 = vrot.slane %v693, 4
        %v695 = vadd.f32 %v693, %v694
        %v696 = vrot.slane %v695, 2
        %v697 = vadd.f32 %v695, %v696
        %v698 = vrot.slane %v697, 1
        %v699 = vadd.f32 %v697, %v698
        %v700 = vsel %vm395, %v619, 0.0
        %v701 = vsel %vm395, %v620, 0.0
        %v702 = vadd.f32 %v700, %v701
        %v703 = vrot.slane %v702, 4
        %v704 = vadd.f32 %v702, %v703
        %v705 = vrot.slane %v704, 2
        %v706 = vadd.f32 %v704, %v705
        %v707 = vrot.slane %v706, 1
        %v708 = vadd.f32 %v706, %v707
        %v709 = vsel %vm395, %v621, 0.0
        %v710 = vsel %vm395, %v622, 0.0
        %v711 = vadd.f32 %v709, %v710
        %v712 = vrot.slane %v711, 4
        %v713 = vadd.f32 %v711, %v712
        %v714 = vrot.slane %v713, 2
        %v715 = vadd.f32 %v713, %v714
        %v716 = vrot.slane %v715, 1
        %v717 = vadd.f32 %v715, %v716
        %v718 = vsel %vm395, %v623, 0.0
        %v719 = vsel %vm395, %v624, 0.0
        %v720 = vadd.f32 %v718, %v719
        %v721 = vrot.slane %v720, 4
        %v722 = vadd.f32 %v720, %v721
        %v723 = vrot.slane %v722, 2
        %v724 = vadd.f32 %v722, %v723
        %v725 = vrot.slane %v724, 1
        %v726 = vadd.f32 %v724, %v725
        %v727 = vsel %vm395, %v625, 0.0
        %v728 = vsel %vm395, %v626, 0.0
        %v729 = vadd.f32 %v727, %v728
        %v730 = vrot.slane %v729, 4
        %v731 = vadd.f32 %v729, %v730
        %v732 = vrot.slane %v731, 2
        %v733 = vadd.f32 %v731, %v732
        %v734 = vrot.slane %v733, 1
        %v735 = vadd.f32 %v733, %v734
        %v736 = vsel %vm395, %v627, 0.0
        %v737 = vsel %vm395, %v628, 0.0
        %v738 = vadd.f32 %v736, %v737
        %v739 = vrot.slane %v738, 4
        %v740 = vadd.f32 %v738, %v739
        %v741 = vrot.slane %v740, 2
        %v742 = vadd.f32 %v740, %v741
        %v743 = vrot.slane %v742, 1
        %v744 = vadd.f32 %v742, %v743
        %v745 = vsel %vm395, %v629, 0.0
        %v746 = vsel %vm395, %v630, 0.0
        %v747 = vadd.f32 %v745, %v746
        %v748 = vrot.slane %v747, 4
        %v749 = vadd.f32 %v747, %v748
        %v750 = vrot.slane %v749, 2
        %v751 = vadd.f32 %v749, %v750
        %v752 = vrot.slane %v751, 1
        %v753 = vadd.f32 %v751, %v752
        %v754 = vsel %vm395, %v631, 0.0
        %v755 = vsel %vm395, %v632, 0.0
        %v756 = vadd.f32 %v754, %v755
        %v757 = vrot.slane %v756, 4
        %v758 = vadd.f32 %v756, %v757
        %v759 = vrot.slane %v758, 2
        %v760 = vadd.f32 %v758, %v759
        %v761 = vrot.slane %v760, 1
        %v762 = vadd.f32 %v760, %v761
        %v763 = vsel %vm395, %v633, 0.0
        %v764 = vsel %vm395, %v634, 0.0
        %v765 = vadd.f32 %v763, %v764
        %v766 = vrot.slane %v765, 4
        %v767 = vadd.f32 %v765, %v766
        %v768 = vrot.slane %v767, 2
        %v769 = vadd.f32 %v767, %v768
        %v770 = vrot.slane %v769, 1
        %v771 = vadd.f32 %v769, %v770
        %v772 = vsel %vm395, %v635, 0.0
        %v773 = vsel %vm395, %v636, 0.0
        %v774 = vadd.f32 %v772, %v773
        %v775 = vrot.slane %v774, 4
        %v776 = vadd.f32 %v774, %v775
        %v777 = vrot.slane %v776, 2
        %v778 = vadd.f32 %v776, %v777
        %v779 = vrot.slane %v778, 1
        %v780 = vadd.f32 %v778, %v779
        %v781 = vrcp.pop 16.0
        %v782 = vmul.f32 %v645, %v781
        %v783 = vmul.f32 %v654, %v781
        %v784 = vmul.f32 %v663, %v781
        %v785 = vmul.f32 %v672, %v781
        %v786 = vmul.f32 %v681, %v781
        %v787 = vmul.f32 %v690, %v781
        %v788 = vmul.f32 %v699, %v781
        %v789 = vmul.f32 %v708, %v781
        %v790 = vmul.f32 %v717, %v781
        %v791 = vmul.f32 %v726, %v781
        %v792 = vmul.f32 %v735, %v781
        %v793 = vmul.f32 %v744, %v781
        %v794 = vmul.f32 %v753, %v781
        %v795 = vmul.f32 %v762, %v781
        %v796 = vmul.f32 %v771, %v781
        %v797 = vmul.f32 %v780, %v781
        %v798 = vadd.f32 %v637, %v646
        %v799 = vadd.f32 %v798, %v655
        %v800 = vadd.f32 %v799, %v664
        %v801 = vadd.f32 %v800, %v673
        %v802 = vadd.f32 %v801, %v682
        %v803 = vadd.f32 %v802, %v691
        %v804 = vadd.f32 %v803, %v700
        %v805 = vadd.f32 %v804, %v709
        %v806 = vadd.f32 %v805, %v718
        %v807 = vadd.f32 %v806, %v727
        %v808 = vadd.f32 %v807, %v736
        %v809 = vadd.f32 %v808, %v745
        %v810 = vadd.f32 %v809, %v754
        %v811 = vadd.f32 %v810, %v763
        %v812 = vadd.f32 %v811, %v772
        %v813 = vadd.f32 %v638, %v647
        %v814 = vadd.f32 %v813, %v656
        %v815 = vadd.f32 %v814, %v665
        %v816 = vadd.f32 %v815, %v674
        %v817 = vadd.f32 %v816, %v683
        %v818 = vadd.f32 %v817, %v692
        %v819 = vadd.f32 %v818, %v701
        %v820 = vadd.f32 %v819, %v710
        %v821 = vadd.f32 %v820, %v719
        %v822 = vadd.f32 %v821, %v728
        %v823 = vadd.f32 %v822, %v737
        %v824 = vadd.f32 %v823, %v746
        %v825 = vadd.f32 %v824, %v755
        %v826 = vadd.f32 %v825, %v764
        %v827 = vadd.f32 %v826, %v773
        %v828 = vmul.f32 %v812, %v781
        %v829 = vmul.f32 %v827, %v781
        %v830 = vld [vmem:[%s2] sm:$0xff]
        %v831 = vld [vmem:[%s2 + $0x8] sm:$0xff]
        %v832 = vld [vmem:[%s2 + $0x10] sm:$0xff]
        %v833 = vld [vmem:[%s2 + $0x18] sm:$0xff]
        %v834 = vld [vmem:[%s2 + $0x20] sm:$0xff]
        %v835 = vld [vmem:[%s2 + $0x28] sm:$0xff]
        %v836 = vld [vmem:[%s2 + $0x30] sm:$0xff]
        %v837 = vld [vmem:[%s2 + $0x38] sm:$0xff]
        %vm854 = vcmask 1041409
        %v855 = vsel %vm854, %v783, %v782
        %vm856 = vcmask 1042434
        %v857 = vsel %vm856, %v784, %v855
        %vm858 = vcmask 1043459
        %v859 = vsel %vm858, %v785, %v857
        %vm860 = vcmask 1044484
        %v861 = vsel %vm860, %v786, %v859
        %vm862 = vcmask 1045509
        %v863 = vsel %vm862, %v787, %v861
        %vm864 = vcmask 1046534
        %v865 = vsel %vm864, %v788, %v863
        %vm866 = vcmask 1047559
        %v867 = vsel %vm866, %v789, %v865
        %v868 = vsel %vm854, %v791, %v790
        %v869 = vsel %vm856, %v792, %v868
        %v870 = vsel %vm858, %v793, %v869
        %v871 = vsel %vm860, %v794, %v870
        %v872 = vsel %vm862, %v795, %v871
        %v873 = vsel %vm864, %v796, %v872
        %v874 = vsel %vm866, %v797, %v873
        %v875 = vsel %vm395, %v867, 0
        %v877 = vsel %vm395, %v874, 0
        %879 = vmatprep.subr.mxu0 0.0
        %880 = vmatpush1.msra.mxu0 %v830
        %881 = vmatprep.subr.mxu0 0.0
        %882 = vmatpush1.msra.mxu0 %v831
        %883 = vmatprep.subr.mxu0 0.0
        %884 = vmatpush1.msra.mxu0 %v832
        %885 = vmatprep.subr.mxu0 0.0
        %886 = vmatpush1.msra.mxu0 %v833
        %887 = vmatprep.subr.mxu0 0.0
        %888 = vmatpush1.msra.mxu0 %v834
        %889 = vmatprep.subr.mxu0 0.0
        %890 = vmatpush1.msra.mxu0 %v835
        %891 = vmatprep.subr.mxu0 0.0
        %892 = vmatpush1.msra.mxu0 %v836
        %893 = vmatprep.subr.mxu0 0.0
        %894 = vmatpush1.msra.mxu0 %v837
        %895 = vmatprep.subr.mxu0 0.0
        %896 = vmatpush1.msra.mxu0 0.0
        %897 = vmatprep.subr.mxu0 0.0
        %898 = vmatpush1.msra.mxu0 0.0
        %899 = vmatprep.subr.mxu0 0.0
        %900 = vmatpush1.msra.mxu0 0.0
        %901 = vmatprep.subr.mxu0 0.0
        %902 = vmatpush1.msra.mxu0 0.0
        %903 = vmatprep.subr.mxu0 0.0
        %904 = vmatpush1.msra.mxu0 0.0
        %905 = vmatprep.subr.mxu0 0.0
        %906 = vmatpush1.msra.mxu0 0.0
        %907 = vmatprep.subr.mxu0 0.0
        %908 = vmatpush1.msra.mxu0 0.0
        %909 = vmatprep.subr.mxu0 0.0
        %910 = vmatpush1.msra.mxu0 0.0
        %911 = vmatprep.subr.mxu0 0.0
        %912 = vmatpush1.msra.mxu0 0.0
        %913 = vmatprep.subr.mxu0 0.0
        %914 = vmatpush1.msra.mxu0 0.0
        %915 = vmatprep.subr.mxu0 0.0
        %916 = vmatpush1.msra.mxu0 0.0
        %917 = vmatprep.subr.mxu0 0.0
        %918 = vmatpush1.msra.mxu0 0.0
        %919 = vmatprep.subr.mxu0 0.0
        %920 = vmatpush1.msra.mxu0 0.0
        %921 = vmatprep.subr.mxu0 0.0
        %922 = vmatpush1.msra.mxu0 0.0
        %923 = vmatprep.subr.mxu0 0.0
        %924 = vmatpush1.msra.mxu0 0.0
        %925 = vmatprep.subr.mxu0 0.0
        %926 = vmatpush1.msra.mxu0 0.0
        %927 = vmatprep.subr.mxu0 0.0
        %928 = vmatpush1.msra.mxu0 0.0
        %929 = vmatprep.subr.mxu0 0.0
        %930 = vmatpush1.msra.mxu0 0.0
        %931 = vmatprep.subr.mxu0 0.0
        %932 = vmatpush1.msra.mxu0 0.0
        %933 = vmatprep.subr.mxu0 0.0
        %934 = vmatpush1.msra.mxu0 0.0
        %935 = vmatprep.subr.mxu0 0.0
        %936 = vmatpush1.msra.mxu0 0.0
        %937 = vmatprep.subr.mxu0 0.0
        %938 = vmatpush1.msra.mxu0 0.0
        %939 = vmatprep.subr.mxu0 0.0
        %940 = vmatpush1.msra.mxu0 0.0
        %941 = vmatprep.subr.mxu0 0.0
        %942 = vmatpush1.msra.mxu0 0.0
        %943 = vmatprep.mubr.f32.mxu0 0.0
        %944 = vmatmul.mubr.f32.gmra.mrb[0].mxu0 %v875
        %v945 = vpop.f32.mrb[0].mxu0
        %v946 = vadd.f32 0.0, %v945
        %v947 = vpop.f32.mrb[0].mxu0
        %948 = vmatprep.mubr.f32.mxu0 0.0
        %949 = vmatmul.mubr.f32.gmra.mrb[0].mxu0 %v877
        %v950 = vpop.f32.mrb[0].mxu0
        %v951 = vadd.f32 0.0, %v950
        %v952 = vpop.f32.mrb[0].mxu0
        %953 = vdwg.mxu0
        %v955 = vsel %vm395, %v828, 0
        %v958 = vsel %vm395, %v829, 0
        %960 = vmatprep.subr.mxu0 0.0
        %961 = vmatpush1.msra.mxu0 %v830
        %962 = vmatprep.subr.mxu0 0.0
        %963 = vmatpush1.msra.mxu0 %v831
        %964 = vmatprep.subr.mxu0 0.0
        %965 = vmatpush1.msra.mxu0 %v832
        %966 = vmatprep.subr.mxu0 0.0
        %967 = vmatpush1.msra.mxu0 %v833
        %968 = vmatprep.subr.mxu0 0.0
        %969 = vmatpush1.msra.mxu0 %v834
        %970 = vmatprep.subr.mxu0 0.0
        %971 = vmatpush1.msra.mxu0 %v835
        %972 = vmatprep.subr.mxu0 0.0
        %973 = vmatpush1.msra.mxu0 %v836
        %974 = vmatprep.subr.mxu0 0.0
        %975 = vmatpush1.msra.mxu0 %v837
        %976 = vmatprep.subr.mxu0 0.0
        %977 = vmatpush1.msra.mxu0 0.0
        %978 = vmatprep.subr.mxu0 0.0
        %979 = vmatpush1.msra.mxu0 0.0
        %980 = vmatprep.subr.mxu0 0.0
        %981 = vmatpush1.msra.mxu0 0.0
        %982 = vmatprep.subr.mxu0 0.0
        %983 = vmatpush1.msra.mxu0 0.0
        %984 = vmatprep.subr.mxu0 0.0
        %985 = vmatpush1.msra.mxu0 0.0
        %986 = vmatprep.subr.mxu0 0.0
        %987 = vmatpush1.msra.mxu0 0.0
        %988 = vmatprep.subr.mxu0 0.0
        %989 = vmatpush1.msra.mxu0 0.0
        %990 = vmatprep.subr.mxu0 0.0
        %991 = vmatpush1.msra.mxu0 0.0
        %992 = vmatprep.subr.mxu0 0.0
        %993 = vmatpush1.msra.mxu0 0.0
        %994 = vmatprep.subr.mxu0 0.0
        %995 = vmatpush1.msra.mxu0 0.0
        %996 = vmatprep.subr.mxu0 0.0
        %997 = vmatpush1.msra.mxu0 0.0
        %998 = vmatprep.subr.mxu0 0.0
        %999 = vmatpush1.msra.mxu0 0.0
        %1000 = vmatprep.subr.mxu0 0.0
        %1001 = vmatpush1.msra.mxu0 0.0
        %1002 = vmatprep.subr.mxu0 0.0
        %1003 = vmatpush1.msra.mxu0 0.0
        %1004 = vmatprep.subr.mxu0 0.0
        %1005 = vmatpush1.msra.mxu0 0.0
        %1006 = vmatprep.subr.mxu0 0.0
        %1007 = vmatpush1.msra.mxu0 0.0
        %1008 = vmatprep.subr.mxu0 0.0
        %1009 = vmatpush1.msra.mxu0 0.0
        %1010 = vmatprep.subr.mxu0 0.0
        %1011 = vmatpush1.msra.mxu0 0.0
        %1012 = vmatprep.subr.mxu0 0.0
        %1013 = vmatpush1.msra.mxu0 0.0
        %1014 = vmatprep.subr.mxu0 0.0
        %1015 = vmatpush1.msra.mxu0 0.0
        %1016 = vmatprep.subr.mxu0 0.0
        %1017 = vmatpush1.msra.mxu0 0.0
        %1018 = vmatprep.subr.mxu0 0.0
        %1019 = vmatpush1.msra.mxu0 0.0
        %1020 = vmatprep.subr.mxu0 0.0
        %1021 = vmatpush1.msra.mxu0 0.0
        %1022 = vmatprep.subr.mxu0 0.0
        %1023 = vmatpush1.msra.mxu0 0.0
        %1024 = vmatprep.mubr.f32.mxu0 0.0
        %1025 = vmatmul.mubr.f32.gmra.mrb[0].mxu0 %v955
        %v1026 = vpop.f32.mrb[0].mxu0
        %v1027 = vadd.f32 0.0, %v1026
        %v1028 = vpop.f32.mrb[0].mxu0
        %1029 = vmatprep.mubr.f32.mxu0 0.0
        %1030 = vmatmul.mubr.f32.gmra.mrb[0].mxu0 %v958
        %v1031 = vpop.f32.mrb[0].mxu0
        %v1032 = vadd.f32 0.0, %v1031
        %v1033 = vpop.f32.mrb[0].mxu0
        %1034 = vdwg.mxu0
        %v1035 = vld [vmem:[%s4] sm:$0x1]
        %v1036 = vld [vmem:[%s5] sm:$0x1]
        %v1038 = vlaneseq
        %v1039 = vshrl.u32 %v1038, 7
        %v1040 = vsub.s32 0, %v1039
        %v1041 = vrot.slane %v1035, %v1040
        %v1043 = vmul.f32 %v946, %v1041
        %v1044 = vmul.f32 %v951, %v1041
        %v1046 = vlaneseq
        %v1047 = vshrl.u32 %v1046, 7
        %v1048 = vsub.s32 0, %v1047
        %v1049 = vrot.slane %v1036, %v1048
        %v1051 = vadd.f32 %v1043, %v1049
        %v1052 = vadd.f32 %v1044, %v1049
        %v1053 = vmax.f32 %v1051, 0.0
        %v1054 = vmax.f32 %v1052, 0.0
        %v1055 = vmul.f32 %v1027, %v1041
        %v1056 = vmul.f32 %v1032, %v1041
        %v1057 = vadd.f32 %v1055, %v1049
        %v1058 = vadd.f32 %v1056, %v1049
        %v1059 = vmax.f32 %v1057, 0.0
        %v1060 = vmax.f32 %v1058, 0.0
        %v1061 = vmax.f32 %v946, 0.0
        %v1062 = vmax.f32 %v951, 0.0
        %v1063 = vmax.f32 %v1027, 0.0
        %v1064 = vmax.f32 %v1032, 0.0
        %v1065 = vld [vmem:[%s3] sm:$0x3]
        %1067 = vset.pattern.permute.xlu0 0
        %1068 = vperm.xlu0 %1067, %v1053
        %v1069 = vpop.permute.xlu0 %1068
        %1072 = vset.pattern.permute.xlu0 0
        %1073 = vperm.xlu0 %1072, %v1054
        %v1074 = vpop.permute.xlu0 %1073
        %v1076 = vlaneseq
        %v1077 = vshrl.u32 %v1076, 7
        %v1078 = vsub.s32 0, %v1077
        %v1079 = vrot.slane %v1065, %v1078
        %v1080 = vmul.f32 %v1069, %v1079
        %v1081 = vmul.f32 %v1074, %v1079
        %1082 = vset.pattern.permute.xlu0 1
        %1083 = vperm.xlu0 %1082, %v1053
        %v1084 = vpop.permute.xlu0 %1083
        %1086 = vset.pattern.permute.xlu0 1
        %1087 = vperm.xlu0 %1086, %v1054
        %v1088 = vpop.permute.xlu0 %1087
        %v1090 = vlaneseq
        %v1091 = vshrl.u32 %v1090, 7
        %v1092 = vsub.s32 1, %v1091
        %v1093 = vrot.slane %v1065, %v1092
        %v1094 = vmul.f32 %v1084, %v1093
        %v1095 = vmul.f32 %v1088, %v1093
        %v1096 = vadd.f32 %v1080, %v1094
        %v1097 = vadd.f32 %v1081, %v1095
        %v1098 = vxor.u32 %v1096, 2147483648
        %v1099 = vxor.u32 %v1097, 2147483648
        %v1100 = vmul.f32 %v1098, 1.442695
        %v1101 = vpow.pop %v1100
        %v1102 = vmul.f32 %v1099, 1.442695
        %v1103 = vpow.pop %v1102
        %v1104 = vadd.f32 %v1101, 1.0
        %v1105 = vadd.f32 %v1103, 1.0
        %v1106 = vrcp.pop %v1104
        %v1107 = vmul.f32 1.0, %v1106
        %v1108 = vrcp.pop %v1105
        %v1109 = vmul.f32 1.0, %v1108
        %s1110 = scalar_lea.vmem %s3, 2
        %v1111 = vld [vmem:[%s1110] sm:$0x3]
        %1113 = vset.pattern.permute.xlu0 0
        %1114 = vperm.xlu0 %1113, %v1059
        %v1115 = vpop.permute.xlu0 %1114
        %1118 = vset.pattern.permute.xlu0 0
        %1119 = vperm.xlu0 %1118, %v1060
        %v1120 = vpop.permute.xlu0 %1119
        %v1122 = vlaneseq
        %v1123 = vshrl.u32 %v1122, 7
        %v1124 = vsub.s32 0, %v1123
        %v1125 = vrot.slane %v1111, %v1124
        %v1126 = vmul.f32 %v1115, %v1125
        %v1127 = vmul.f32 %v1120, %v1125
        %1128 = vset.pattern.permute.xlu0 1
        %1129 = vperm.xlu0 %1128, %v1059
        %v1130 = vpop.permute.xlu0 %1129
        %1132 = vset.pattern.permute.xlu0 1
        %1133 = vperm.xlu0 %1132, %v1060
        %v1134 = vpop.permute.xlu0 %1133
        %v1136 = vlaneseq
        %v1137 = vshrl.u32 %v1136, 7
        %v1138 = vsub.s32 1, %v1137
        %v1139 = vrot.slane %v1111, %v1138
        %v1140 = vmul.f32 %v1130, %v1139
        %v1141 = vmul.f32 %v1134, %v1139
        %v1142 = vadd.f32 %v1126, %v1140
        %v1143 = vadd.f32 %v1127, %v1141
        %v1144 = vxor.u32 %v1142, 2147483648
        %v1145 = vxor.u32 %v1143, 2147483648
        %v1146 = vmul.f32 %v1144, 1.442695
        %v1147 = vpow.pop %v1146
        %v1148 = vmul.f32 %v1145, 1.442695
        %v1149 = vpow.pop %v1148
        %v1150 = vadd.f32 %v1147, 1.0
        %v1151 = vadd.f32 %v1149, 1.0
        %v1152 = vrcp.pop %v1150
        %v1153 = vmul.f32 1.0, %v1152
        %v1154 = vrcp.pop %v1151
        %v1155 = vmul.f32 1.0, %v1154
        %s1156 = scalar_lea.vmem %s3, 4
        %v1157 = vld [vmem:[%s1156] sm:$0x3]
        %1159 = vset.pattern.permute.xlu0 2
        %1160 = vperm.xlu0 %1159, %v1061
        %v1161 = vpop.permute.xlu0 %1160
        %1164 = vset.pattern.permute.xlu0 2
        %1165 = vperm.xlu0 %1164, %v1062
        %v1166 = vpop.permute.xlu0 %1165
        %v1168 = vlaneseq
        %v1169 = vshrl.u32 %v1168, 7
        %v1170 = vsub.s32 0, %v1169
        %v1171 = vrot.slane %v1157, %v1170
        %v1172 = vmul.f32 %v1161, %v1171
        %v1173 = vmul.f32 %v1166, %v1171
        %1174 = vset.pattern.permute.xlu0 3
        %1175 = vperm.xlu0 %1174, %v1061
        %v1176 = vpop.permute.xlu0 %1175
        %1178 = vset.pattern.permute.xlu0 3
        %1179 = vperm.xlu0 %1178, %v1062
        %v1180 = vpop.permute.xlu0 %1179
        %v1182 = vlaneseq
        %v1183 = vshrl.u32 %v1182, 7
        %v1184 = vsub.s32 1, %v1183
        %v1185 = vrot.slane %v1157, %v1184
        %v1186 = vmul.f32 %v1176, %v1185
        %v1187 = vmul.f32 %v1180, %v1185
        %v1188 = vadd.f32 %v1172, %v1186
        %v1189 = vadd.f32 %v1173, %v1187
        %v1190 = vxor.u32 %v1188, 2147483648
        %v1191 = vxor.u32 %v1189, 2147483648
        %v1192 = vmul.f32 %v1190, 1.442695
        %v1193 = vpow.pop %v1192
        %v1194 = vmul.f32 %v1191, 1.442695
        %v1195 = vpow.pop %v1194
        %v1196 = vadd.f32 %v1193, 1.0
        %v1197 = vadd.f32 %v1195, 1.0
        %v1198 = vrcp.pop %v1196
        %v1199 = vmul.f32 1.0, %v1198
        %v1200 = vrcp.pop %v1197
        %v1201 = vmul.f32 1.0, %v1200
        %s1202 = scalar_lea.vmem %s3, 6
        %v1203 = vld [vmem:[%s1202] sm:$0x3]
        %1205 = vset.pattern.permute.xlu0 2
        %1206 = vperm.xlu0 %1205, %v1063
        %v1207 = vpop.permute.xlu0 %1206
        %1210 = vset.pattern.permute.xlu0 2
        %1211 = vperm.xlu0 %1210, %v1064
        %v1212 = vpop.permute.xlu0 %1211
        %v1214 = vlaneseq
        %v1215 = vshrl.u32 %v1214, 7
        %v1216 = vsub.s32 0, %v1215
        %v1217 = vrot.slane %v1203, %v1216
        %v1218 = vmul.f32 %v1207, %v1217
        %v1219 = vmul.f32 %v1212, %v1217
        %1220 = vset.pattern.permute.xlu0 3
        %1221 = vperm.xlu0 %1220, %v1063
        %v1222 = vpop.permute.xlu0 %1221
        %1224 = vset.pattern.permute.xlu0 3
        %1225 = vperm.xlu0 %1224, %v1064
        %v1226 = vpop.permute.xlu0 %1225
        %v1228 = vlaneseq
        %v1229 = vshrl.u32 %v1228, 7
        %v1230 = vsub.s32 1, %v1229
        %v1231 = vrot.slane %v1203, %v1230
        %v1232 = vmul.f32 %v1222, %v1231
        %v1233 = vmul.f32 %v1226, %v1231
        %v1234 = vadd.f32 %v1218, %v1232
        %v1235 = vadd.f32 %v1219, %v1233
        %v1236 = vxor.u32 %v1234, 2147483648
        %v1237 = vxor.u32 %v1235, 2147483648
        %v1238 = vmul.f32 %v1236, 1.442695
        %v1239 = vpow.pop %v1238
        %v1240 = vmul.f32 %v1237, 1.442695
        %v1241 = vpow.pop %v1240
        %v1242 = vadd.f32 %v1239, 1.0
        %v1243 = vadd.f32 %v1241, 1.0
        %v1244 = vrcp.pop %v1242
        %v1245 = vmul.f32 1.0, %v1244
        %v1246 = vrcp.pop %v1243
        %v1247 = vmul.f32 1.0, %v1246
        %v1250 = vcombine.high %v1107, %v1107
        %v1252 = vunpack.c.l.s4 1966171168
        %v1253 = vunpack.c.0.s8 %v1252
        %v1254 = vlaneseq
        %v1255 = vshrl.u32 %v1254, 7
        %v1256 = vsub.s32 %v1253, %v1255
        %v1257 = vrot.slane %v1107, %v1256
        %v1259 = vunpack.c.l.s4 1966171168
        %v1260 = vunpack.c.0.s8 %v1259
        %v1261 = vlaneseq
        %v1262 = vshrl.u32 %v1261, 7
        %v1263 = vsub.s32 %v1260, %v1262
        %v1264 = vrot.slane %v1250, %v1263
        %v1265 = vcombine.high %v1257, %v1257
        %v1266 = vcombine.high %v1264, %v1264
        %v1268 = vunpack.c.l.s4 1966171168
        %v1269 = vunpack.c.0.s8 %v1268
        %v1270 = vlaneseq
        %v1271 = vshrl.u32 %v1270, 7
        %v1272 = vsub.s32 %v1269, %v1271
        %v1273 = vrot.slane %v1257, %v1272
        %v1275 = vunpack.c.l.s4 1966171168
        %v1276 = vunpack.c.0.s8 %v1275
        %v1277 = vlaneseq
        %v1278 = vshrl.u32 %v1277, 7
        %v1279 = vsub.s32 %v1276, %v1278
        %v1280 = vrot.slane %v1264, %v1279
        %v1282 = vunpack.c.l.s4 1966171168
        %v1283 = vunpack.c.0.s8 %v1282
        %v1284 = vlaneseq
        %v1285 = vshrl.u32 %v1284, 7
        %v1286 = vsub.s32 %v1283, %v1285
        %v1287 = vrot.slane %v1265, %v1286
        %v1289 = vunpack.c.l.s4 1966171168
        %v1290 = vunpack.c.0.s8 %v1289
        %v1291 = vlaneseq
        %v1292 = vshrl.u32 %v1291, 7
        %v1293 = vsub.s32 %v1290, %v1292
        %v1294 = vrot.slane %v1266, %v1293
        %v1295 = vcombine.high %v1273, %v1273
        %v1296 = vcombine.high %v1280, %v1280
        %v1297 = vcombine.high %v1287, %v1287
        %v1298 = vcombine.high %v1294, %v1294
        %v1299 = vcombine.high %v1109, %v1109
        %v1301 = vunpack.c.l.s4 1966171168
        %v1302 = vunpack.c.0.s8 %v1301
        %v1303 = vlaneseq
        %v1304 = vshrl.u32 %v1303, 7
        %v1305 = vsub.s32 %v1302, %v1304
        %v1306 = vrot.slane %v1109, %v1305
        %v1308 = vunpack.c.l.s4 1966171168
        %v1309 = vunpack.c.0.s8 %v1308
        %v1310 = vlaneseq
        %v1311 = vshrl.u32 %v1310, 7
        %v1312 = vsub.s32 %v1309, %v1311
        %v1313 = vrot.slane %v1299, %v1312
        %v1314 = vcombine.high %v1306, %v1306
        %v1315 = vcombine.high %v1313, %v1313
        %v1317 = vunpack.c.l.s4 1966171168
        %v1318 = vunpack.c.0.s8 %v1317
        %v1319 = vlaneseq
        %v1320 = vshrl.u32 %v1319, 7
        %v1321 = vsub.s32 %v1318, %v1320
        %v1322 = vrot.slane %v1306, %v1321
        %v1324 = vunpack.c.l.s4 1966171168
        %v1325 = vunpack.c.0.s8 %v1324
        %v1326 = vlaneseq
        %v1327 = vshrl.u32 %v1326, 7
        %v1328 = vsub.s32 %v1325, %v1327
        %v1329 = vrot.slane %v1313, %v1328
        %v1331 = vunpack.c.l.s4 1966171168
        %v1332 = vunpack.c.0.s8 %v1331
        %v1333 = vlaneseq
        %v1334 = vshrl.u32 %v1333, 7
        %v1335 = vsub.s32 %v1332, %v1334
        %v1336 = vrot.slane %v1314, %v1335
        %v1338 = vunpack.c.l.s4 1966171168
        %v1339 = vunpack.c.0.s8 %v1338
        %v1340 = vlaneseq
        %v1341 = vshrl.u32 %v1340, 7
        %v1342 = vsub.s32 %v1339, %v1341
        %v1343 = vrot.slane %v1315, %v1342
        %v1344 = vcombine.high %v1322, %v1322
        %v1345 = vcombine.high %v1329, %v1329
        %v1346 = vcombine.high %v1336, %v1336
        %v1347 = vcombine.high %v1343, %v1343
        %v1348 = vlaneseq
        %v1349 = vshrl.u32 %v1348, 7
        %v1350 = vsub.s32 0, %v1349
        %v1351 = vrot.slane %v1273, %v1350
        %v1352 = vlaneseq
        %v1353 = vshrl.u32 %v1352, 7
        %v1354 = vsub.s32 0, %v1353
        %v1355 = vrot.slane %v1287, %v1354
        %v1356 = vlaneseq
        %v1357 = vshrl.u32 %v1356, 7
        %v1358 = vsub.s32 0, %v1357
        %v1359 = vrot.slane %v1295, %v1358
        %v1360 = vlaneseq
        %v1361 = vshrl.u32 %v1360, 7
        %v1362 = vsub.s32 0, %v1361
        %v1363 = vrot.slane %v1297, %v1362
        %v1364 = vlaneseq
        %v1365 = vshrl.u32 %v1364, 7
        %v1366 = vsub.s32 0, %v1365
        %v1367 = vrot.slane %v1280, %v1366
        %v1368 = vlaneseq
        %v1369 = vshrl.u32 %v1368, 7
        %v1370 = vsub.s32 0, %v1369
        %v1371 = vrot.slane %v1294, %v1370
        %v1372 = vlaneseq
        %v1373 = vshrl.u32 %v1372, 7
        %v1374 = vsub.s32 0, %v1373
        %v1375 = vrot.slane %v1296, %v1374
        %v1376 = vlaneseq
        %v1377 = vshrl.u32 %v1376, 7
        %v1378 = vsub.s32 0, %v1377
        %v1379 = vrot.slane %v1298, %v1378
        %v1380 = vlaneseq
        %v1381 = vshrl.u32 %v1380, 7
        %v1382 = vsub.s32 0, %v1381
        %v1383 = vrot.slane %v1322, %v1382
        %v1384 = vlaneseq
        %v1385 = vshrl.u32 %v1384, 7
        %v1386 = vsub.s32 0, %v1385
        %v1387 = vrot.slane %v1336, %v1386
        %v1388 = vlaneseq
        %v1389 = vshrl.u32 %v1388, 7
        %v1390 = vsub.s32 0, %v1389
        %v1391 = vrot.slane %v1344, %v1390
        %v1392 = vlaneseq
        %v1393 = vshrl.u32 %v1392, 7
        %v1394 = vsub.s32 0, %v1393
        %v1395 = vrot.slane %v1346, %v1394
        %v1396 = vlaneseq
        %v1397 = vshrl.u32 %v1396, 7
        %v1398 = vsub.s32 0, %v1397
        %v1399 = vrot.slane %v1329, %v1398
        %v1400 = vlaneseq
        %v1401 = vshrl.u32 %v1400, 7
        %v1402 = vsub.s32 0, %v1401
        %v1403 = vrot.slane %v1343, %v1402
        %v1404 = vlaneseq
        %v1405 = vshrl.u32 %v1404, 7
        %v1406 = vsub.s32 0, %v1405
        %v1407 = vrot.slane %v1345, %v1406
        %v1408 = vlaneseq
        %v1409 = vshrl.u32 %v1408, 7
        %v1410 = vsub.s32 0, %v1409
        %v1411 = vrot.slane %v1347, %v1410
        %v1428 = vmul.f32 %v1351, %v1153
        %v1429 = vmul.f32 %v1351, %v1155
        %v1430 = vmul.f32 %v1355, %v1153
        %v1431 = vmul.f32 %v1355, %v1155
        %v1432 = vmul.f32 %v1359, %v1153
        %v1433 = vmul.f32 %v1359, %v1155
        %v1434 = vmul.f32 %v1363, %v1153
        %v1435 = vmul.f32 %v1363, %v1155
        %v1436 = vmul.f32 %v1367, %v1153
        %v1437 = vmul.f32 %v1367, %v1155
        %v1438 = vmul.f32 %v1371, %v1153
        %v1439 = vmul.f32 %v1371, %v1155
        %v1440 = vmul.f32 %v1375, %v1153
        %v1441 = vmul.f32 %v1375, %v1155
        %v1442 = vmul.f32 %v1379, %v1153
        %v1443 = vmul.f32 %v1379, %v1155
        %v1444 = vmul.f32 %v1383, %v1153
        %v1445 = vmul.f32 %v1383, %v1155
        %v1446 = vmul.f32 %v1387, %v1153
        %v1447 = vmul.f32 %v1387, %v1155
        %v1448 = vmul.f32 %v1391, %v1153
        %v1449 = vmul.f32 %v1391, %v1155
        %v1450 = vmul.f32 %v1395, %v1153
        %v1451 = vmul.f32 %v1395, %v1155
        %v1452 = vmul.f32 %v1399, %v1153
        %v1453 = vmul.f32 %v1399, %v1155
        %v1454 = vmul.f32 %v1403, %v1153
        %v1455 = vmul.f32 %v1403, %v1155
        %v1456 = vmul.f32 %v1407, %v1153
        %v1457 = vmul.f32 %v1407, %v1155
        %v1458 = vmul.f32 %v1411, %v1153
        %v1459 = vmul.f32 %v1411, %v1155
        %v1462 = vcombine.high %v1199, %v1199
        %v1464 = vunpack.c.l.s4 1966171168
        %v1465 = vunpack.c.0.s8 %v1464
        %v1466 = vlaneseq
        %v1467 = vshrl.u32 %v1466, 7
        %v1468 = vsub.s32 %v1465, %v1467
        %v1469 = vrot.slane %v1199, %v1468
        %v1471 = vunpack.c.l.s4 1966171168
        %v1472 = vunpack.c.0.s8 %v1471
        %v1473 = vlaneseq
        %v1474 = vshrl.u32 %v1473, 7
        %v1475 = vsub.s32 %v1472, %v1474
        %v1476 = vrot.slane %v1462, %v1475
        %v1477 = vcombine.high %v1469, %v1469
        %v1478 = vcombine.high %v1476, %v1476
        %v1480 = vunpack.c.l.s4 1966171168
        %v1481 = vunpack.c.0.s8 %v1480
        %v1482 = vlaneseq
        %v1483 = vshrl.u32 %v1482, 7
        %v1484 = vsub.s32 %v1481, %v1483
        %v1485 = vrot.slane %v1469, %v1484
        %v1487 = vunpack.c.l.s4 1966171168
        %v1488 = vunpack.c.0.s8 %v1487
        %v1489 = vlaneseq
        %v1490 = vshrl.u32 %v1489, 7
        %v1491 = vsub.s32 %v1488, %v1490
        %v1492 = vrot.slane %v1476, %v1491
        %v1494 = vunpack.c.l.s4 1966171168
        %v1495 = vunpack.c.0.s8 %v1494
        %v1496 = vlaneseq
        %v1497 = vshrl.u32 %v1496, 7
        %v1498 = vsub.s32 %v1495, %v1497
        %v1499 = vrot.slane %v1477, %v1498
        %v1501 = vunpack.c.l.s4 1966171168
        %v1502 = vunpack.c.0.s8 %v1501
        %v1503 = vlaneseq
        %v1504 = vshrl.u32 %v1503, 7
        %v1505 = vsub.s32 %v1502, %v1504
        %v1506 = vrot.slane %v1478, %v1505
        %v1507 = vcombine.high %v1485, %v1485
        %v1508 = vcombine.high %v1492, %v1492
        %v1509 = vcombine.high %v1499, %v1499
        %v1510 = vcombine.high %v1506, %v1506
        %v1511 = vcombine.high %v1201, %v1201
        %v1513 = vunpack.c.l.s4 1966171168
        %v1514 = vunpack.c.0.s8 %v1513
        %v1515 = vlaneseq
        %v1516 = vshrl.u32 %v1515, 7
        %v1517 = vsub.s32 %v1514, %v1516
        %v1518 = vrot.slane %v1201, %v1517
        %v1520 = vunpack.c.l.s4 1966171168
        %v1521 = vunpack.c.0.s8 %v1520
        %v1522 = vlaneseq
        %v1523 = vshrl.u32 %v1522, 7
        %v1524 = vsub.s32 %v1521, %v1523
        %v1525 = vrot.slane %v1511, %v1524
        %v1526 = vcombine.high %v1518, %v1518
        %v1527 = vcombine.high %v1525, %v1525
        %v1529 = vunpack.c.l.s4 1966171168
        %v1530 = vunpack.c.0.s8 %v1529
        %v1531 = vlaneseq
        %v1532 = vshrl.u32 %v1531, 7
        %v1533 = vsub.s32 %v1530, %v1532
        %v1534 = vrot.slane %v1518, %v1533
        %v1536 = vunpack.c.l.s4 1966171168
        %v1537 = vunpack.c.0.s8 %v1536
        %v1538 = vlaneseq
        %v1539 = vshrl.u32 %v1538, 7
        %v1540 = vsub.s32 %v1537, %v1539
        %v1541 = vrot.slane %v1525, %v1540
        %v1543 = vunpack.c.l.s4 1966171168
        %v1544 = vunpack.c.0.s8 %v1543
        %v1545 = vlaneseq
        %v1546 = vshrl.u32 %v1545, 7
        %v1547 = vsub.s32 %v1544, %v1546
        %v1548 = vrot.slane %v1526, %v1547
        %v1550 = vunpack.c.l.s4 1966171168
        %v1551 = vunpack.c.0.s8 %v1550
        %v1552 = vlaneseq
        %v1553 = vshrl.u32 %v1552, 7
        %v1554 = vsub.s32 %v1551, %v1553
        %v1555 = vrot.slane %v1527, %v1554
        %v1556 = vcombine.high %v1534, %v1534
        %v1557 = vcombine.high %v1541, %v1541
        %v1558 = vcombine.high %v1548, %v1548
        %v1559 = vcombine.high %v1555, %v1555
        %v1560 = vlaneseq
        %v1561 = vshrl.u32 %v1560, 7
        %v1562 = vsub.s32 0, %v1561
        %v1563 = vrot.slane %v1485, %v1562
        %v1564 = vlaneseq
        %v1565 = vshrl.u32 %v1564, 7
        %v1566 = vsub.s32 0, %v1565
        %v1567 = vrot.slane %v1499, %v1566
        %v1568 = vlaneseq
        %v1569 = vshrl.u32 %v1568, 7
        %v1570 = vsub.s32 0, %v1569
        %v1571 = vrot.slane %v1507, %v1570
        %v1572 = vlaneseq
        %v1573 = vshrl.u32 %v1572, 7
        %v1574 = vsub.s32 0, %v1573
        %v1575 = vrot.slane %v1509, %v1574
        %v1576 = vlaneseq
        %v1577 = vshrl.u32 %v1576, 7
        %v1578 = vsub.s32 0, %v1577
        %v1579 = vrot.slane %v1492, %v1578
        %v1580 = vlaneseq
        %v1581 = vshrl.u32 %v1580, 7
        %v1582 = vsub.s32 0, %v1581
        %v1583 = vrot.slane %v1506, %v1582
        %v1584 = vlaneseq
        %v1585 = vshrl.u32 %v1584, 7
        %v1586 = vsub.s32 0, %v1585
        %v1587 = vrot.slane %v1508, %v1586
        %v1588 = vlaneseq
        %v1589 = vshrl.u32 %v1588, 7
        %v1590 = vsub.s32 0, %v1589
        %v1591 = vrot.slane %v1510, %v1590
        %v1592 = vlaneseq
        %v1593 = vshrl.u32 %v1592, 7
        %v1594 = vsub.s32 0, %v1593
        %v1595 = vrot.slane %v1534, %v1594
        %v1596 = vlaneseq
        %v1597 = vshrl.u32 %v1596, 7
        %v1598 = vsub.s32 0, %v1597
        %v1599 = vrot.slane %v1548, %v1598
        %v1600 = vlaneseq
        %v1601 = vshrl.u32 %v1600, 7
        %v1602 = vsub.s32 0, %v1601
        %v1603 = vrot.slane %v1556, %v1602
        %v1604 = vlaneseq
        %v1605 = vshrl.u32 %v1604, 7
        %v1606 = vsub.s32 0, %v1605
        %v1607 = vrot.slane %v1558, %v1606
        %v1608 = vlaneseq
        %v1609 = vshrl.u32 %v1608, 7
        %v1610 = vsub.s32 0, %v1609
        %v1611 = vrot.slane %v1541, %v1610
        %v1612 = vlaneseq
        %v1613 = vshrl.u32 %v1612, 7
        %v1614 = vsub.s32 0, %v1613
        %v1615 = vrot.slane %v1555, %v1614
        %v1616 = vlaneseq
        %v1617 = vshrl.u32 %v1616, 7
        %v1618 = vsub.s32 0, %v1617
        %v1619 = vrot.slane %v1557, %v1618
        %v1620 = vlaneseq
        %v1621 = vshrl.u32 %v1620, 7
        %v1622 = vsub.s32 0, %v1621
        %v1623 = vrot.slane %v1559, %v1622
        %v1640 = vmul.f32 %v1563, %v1245
        %v1641 = vmul.f32 %v1563, %v1247
        %v1642 = vmul.f32 %v1567, %v1245
        %v1643 = vmul.f32 %v1567, %v1247
        %v1644 = vmul.f32 %v1571, %v1245
        %v1645 = vmul.f32 %v1571, %v1247
        %v1646 = vmul.f32 %v1575, %v1245
        %v1647 = vmul.f32 %v1575, %v1247
        %v1648 = vmul.f32 %v1579, %v1245
        %v1649 = vmul.f32 %v1579, %v1247
        %v1650 = vmul.f32 %v1583, %v1245
        %v1651 = vmul.f32 %v1583, %v1247
        %v1652 = vmul.f32 %v1587, %v1245
        %v1653 = vmul.f32 %v1587, %v1247
        %v1654 = vmul.f32 %v1591, %v1245
        %v1655 = vmul.f32 %v1591, %v1247
        %v1656 = vmul.f32 %v1595, %v1245
        %v1657 = vmul.f32 %v1595, %v1247
        %v1658 = vmul.f32 %v1599, %v1245
        %v1659 = vmul.f32 %v1599, %v1247
        %v1660 = vmul.f32 %v1603, %v1245
        %v1661 = vmul.f32 %v1603, %v1247
        %v1662 = vmul.f32 %v1607, %v1245
        %v1663 = vmul.f32 %v1607, %v1247
        %v1664 = vmul.f32 %v1611, %v1245
        %v1665 = vmul.f32 %v1611, %v1247
        %v1666 = vmul.f32 %v1615, %v1245
        %v1667 = vmul.f32 %v1615, %v1247
        %v1668 = vmul.f32 %v1619, %v1245
        %v1669 = vmul.f32 %v1619, %v1247
        %v1670 = vmul.f32 %v1623, %v1245
        %v1671 = vmul.f32 %v1623, %v1247
        %v1672 = vadd.f32 %v1428, %v1640
        %v1673 = vadd.f32 %v1429, %v1641
        %v1674 = vadd.f32 %v1430, %v1642
        %v1675 = vadd.f32 %v1431, %v1643
        %v1676 = vadd.f32 %v1432, %v1644
        %v1677 = vadd.f32 %v1433, %v1645
        %v1678 = vadd.f32 %v1434, %v1646
        %v1679 = vadd.f32 %v1435, %v1647
        %v1680 = vadd.f32 %v1436, %v1648
        %v1681 = vadd.f32 %v1437, %v1649
        %v1682 = vadd.f32 %v1438, %v1650
        %v1683 = vadd.f32 %v1439, %v1651
        %v1684 = vadd.f32 %v1440, %v1652
        %v1685 = vadd.f32 %v1441, %v1653
        %v1686 = vadd.f32 %v1442, %v1654
        %v1687 = vadd.f32 %v1443, %v1655
        %v1688 = vadd.f32 %v1444, %v1656
        %v1689 = vadd.f32 %v1445, %v1657
        %v1690 = vadd.f32 %v1446, %v1658
        %v1691 = vadd.f32 %v1447, %v1659
        %v1692 = vadd.f32 %v1448, %v1660
        %v1693 = vadd.f32 %v1449, %v1661
        %v1694 = vadd.f32 %v1450, %v1662
        %v1695 = vadd.f32 %v1451, %v1663
        %v1696 = vadd.f32 %v1452, %v1664
        %v1697 = vadd.f32 %v1453, %v1665
        %v1698 = vadd.f32 %v1454, %v1666
        %v1699 = vadd.f32 %v1455, %v1667
        %v1700 = vadd.f32 %v1456, %v1668
        %v1701 = vadd.f32 %v1457, %v1669
        %v1702 = vadd.f32 %v1458, %v1670
        %v1703 = vadd.f32 %v1459, %v1671
        %v1704 = vmul.f32 %v479, %v1672
        %v1705 = vmul.f32 %v482, %v1673
        %v1706 = vmul.f32 %v487, %v1674
        %v1707 = vmul.f32 %v490, %v1675
        %v1708 = vmul.f32 %v495, %v1676
        %v1709 = vmul.f32 %v498, %v1677
        %v1710 = vmul.f32 %v503, %v1678
        %v1711 = vmul.f32 %v506, %v1679
        %v1712 = vmul.f32 %v511, %v1680
        %v1713 = vmul.f32 %v514, %v1681
        %v1714 = vmul.f32 %v519, %v1682
        %v1715 = vmul.f32 %v522, %v1683
        %v1716 = vmul.f32 %v527, %v1684
        %v1717 = vmul.f32 %v530, %v1685
        %v1718 = vmul.f32 %v535, %v1686
        %v1719 = vmul.f32 %v538, %v1687
        %v1720 = vmul.f32 %v543, %v1688
        %v1721 = vmul.f32 %v546, %v1689
        %v1722 = vmul.f32 %v551, %v1690
        %v1723 = vmul.f32 %v554, %v1691
        %v1724 = vmul.f32 %v559, %v1692
        %v1725 = vmul.f32 %v562, %v1693
        %v1726 = vmul.f32 %v567, %v1694
        %v1727 = vmul.f32 %v570, %v1695
        %v1728 = vmul.f32 %v575, %v1696
        %v1729 = vmul.f32 %v578, %v1697
        %v1730 = vmul.f32 %v583, %v1698
        %v1731 = vmul.f32 %v586, %v1699
        %v1732 = vmul.f32 %v591, %v1700
        %v1733 = vmul.f32 %v594, %v1701
        %v1734 = vmul.f32 %v599, %v1702
        %v1735 = vmul.f32 %v602, %v1703
        %v1736 = vpack.c.bf16 %v1705, %v1704
        %v1737 = vpack.c.bf16 %v1707, %v1706
        %v1738 = vpack.c.bf16 %v1709, %v1708
        %v1739 = vpack.c.bf16 %v1711, %v1710
        %v1740 = vpack.c.bf16 %v1713, %v1712
        %v1741 = vpack.c.bf16 %v1715, %v1714
        %v1742 = vpack.c.bf16 %v1717, %v1716
        %v1743 = vpack.c.bf16 %v1719, %v1718
        %v1744 = vpack.c.bf16 %v1721, %v1720
        %v1745 = vpack.c.bf16 %v1723, %v1722
        %v1746 = vpack.c.bf16 %v1725, %v1724
        %v1747 = vpack.c.bf16 %v1727, %v1726
        %v1748 = vpack.c.bf16 %v1729, %v1728
        %v1749 = vpack.c.bf16 %v1731, %v1730
        %v1750 = vpack.c.bf16 %v1733, %v1732
        %v1751 = vpack.c.bf16 %v1735, %v1734
        %v1768 = vunpack.c.l.b16 %v1736
        %v1769 = vunpack.c.h.b16 %v1736
        %v1770 = vunpack.c.l.b16 %v1737
        %v1771 = vunpack.c.h.b16 %v1737
        %v1772 = vunpack.c.l.b16 %v1738
        %v1773 = vunpack.c.h.b16 %v1738
        %v1774 = vunpack.c.l.b16 %v1739
        %v1775 = vunpack.c.h.b16 %v1739
        %v1776 = vunpack.c.l.b16 %v1740
        %v1777 = vunpack.c.h.b16 %v1740
        %v1778 = vunpack.c.l.b16 %v1741
        %v1779 = vunpack.c.h.b16 %v1741
        %v1780 = vunpack.c.l.b16 %v1742
        %v1781 = vunpack.c.h.b16 %v1742
        %v1782 = vunpack.c.l.b16 %v1743
        %v1783 = vunpack.c.h.b16 %v1743
        %v1784 = vunpack.c.l.b16 %v1744
        %v1785 = vunpack.c.h.b16 %v1744
        %v1786 = vunpack.c.l.b16 %v1745
        %v1787 = vunpack.c.h.b16 %v1745
        %v1788 = vunpack.c.l.b16 %v1746
        %v1789 = vunpack.c.h.b16 %v1746
        %v1790 = vunpack.c.l.b16 %v1747
        %v1791 = vunpack.c.h.b16 %v1747
        %v1792 = vunpack.c.l.b16 %v1748
        %v1793 = vunpack.c.h.b16 %v1748
        %v1794 = vunpack.c.l.b16 %v1749
        %v1795 = vunpack.c.h.b16 %v1749
        %v1796 = vunpack.c.l.b16 %v1750
        %v1797 = vunpack.c.h.b16 %v1750
        %v1798 = vunpack.c.l.b16 %v1751
        %v1799 = vunpack.c.h.b16 %v1751
        %v1800 = vpack.c.b16 %v1768, %v1768
        %v1801 = vpack.c.b16 %v1769, %v1769
        %v1802 = vpack.c.b16 %v1770, %v1770
        %v1803 = vpack.c.b16 %v1771, %v1771
        %v1804 = vpack.c.b16 %v1772, %v1772
        %v1805 = vpack.c.b16 %v1773, %v1773
        %v1806 = vpack.c.b16 %v1774, %v1774
        %v1807 = vpack.c.b16 %v1775, %v1775
        %v1808 = vpack.c.b16 %v1776, %v1776
        %v1809 = vpack.c.b16 %v1777, %v1777
        %v1810 = vpack.c.b16 %v1778, %v1778
        %v1811 = vpack.c.b16 %v1779, %v1779
        %v1812 = vpack.c.b16 %v1780, %v1780
        %v1813 = vpack.c.b16 %v1781, %v1781
        %v1814 = vpack.c.b16 %v1782, %v1782
        %v1815 = vpack.c.b16 %v1783, %v1783
        %v1816 = vpack.c.b16 %v1784, %v1784
        %v1817 = vpack.c.b16 %v1785, %v1785
        %v1818 = vpack.c.b16 %v1786, %v1786
        %v1819 = vpack.c.b16 %v1787, %v1787
        %v1820 = vpack.c.b16 %v1788, %v1788
        %v1821 = vpack.c.b16 %v1789, %v1789
        %v1822 = vpack.c.b16 %v1790, %v1790
        %v1823 = vpack.c.b16 %v1791, %v1791
        %v1824 = vpack.c.b16 %v1792, %v1792
        %v1825 = vpack.c.b16 %v1793, %v1793
        %v1826 = vpack.c.b16 %v1794, %v1794
        %v1827 = vpack.c.b16 %v1795, %v1795
        %v1828 = vpack.c.b16 %v1796, %v1796
        %v1829 = vpack.c.b16 %v1797, %v1797
        %v1830 = vpack.c.b16 %v1798, %v1798
        %v1831 = vpack.c.b16 %v1799, %v1799
        %vm1864 = vcmask 257024
        %1865 = vst.msk [vmem:[%s244] sm:$0xf] %vm1864, %v1800
        %1866 = vst.msk [vmem:[%s244 + $0x4] sm:$0xf] %vm1864, %v1801
        %1867 = vst.msk [vmem:[%s244 + $0x8] sm:$0xf] %vm1864, %v1802
        %1868 = vst.msk [vmem:[%s244 + $0xc] sm:$0xf] %vm1864, %v1803
        %1869 = vst.msk [vmem:[%s244 + $0x10] sm:$0xf] %vm1864, %v1804
        %1870 = vst.msk [vmem:[%s244 + $0x14] sm:$0xf] %vm1864, %v1805
        %1871 = vst.msk [vmem:[%s244 + $0x18] sm:$0xf] %vm1864, %v1806
        %1872 = vst.msk [vmem:[%s244 + $0x1c] sm:$0xf] %vm1864, %v1807
        %1873 = vst.msk [vmem:[%s244 + $0x20] sm:$0xf] %vm1864, %v1808
        %1874 = vst.msk [vmem:[%s244 + $0x24] sm:$0xf] %vm1864, %v1809
        %1875 = vst.msk [vmem:[%s244 + $0x28] sm:$0xf] %vm1864, %v1810
        %1876 = vst.msk [vmem:[%s244 + $0x2c] sm:$0xf] %vm1864, %v1811
        %1877 = vst.msk [vmem:[%s244 + $0x30] sm:$0xf] %vm1864, %v1812
        %1878 = vst.msk [vmem:[%s244 + $0x34] sm:$0xf] %vm1864, %v1813
        %1879 = vst.msk [vmem:[%s244 + $0x38] sm:$0xf] %vm1864, %v1814
        %1880 = vst.msk [vmem:[%s244 + $0x3c] sm:$0xf] %vm1864, %v1815
        %1881 = vst.msk [vmem:[%s244 + $0x40] sm:$0xf] %vm1864, %v1816
        %1882 = vst.msk [vmem:[%s244 + $0x44] sm:$0xf] %vm1864, %v1817
        %1883 = vst.msk [vmem:[%s244 + $0x48] sm:$0xf] %vm1864, %v1818
        %1884 = vst.msk [vmem:[%s244 + $0x4c] sm:$0xf] %vm1864, %v1819
        %1885 = vst.msk [vmem:[%s244 + $0x50] sm:$0xf] %vm1864, %v1820
        %1886 = vst.msk [vmem:[%s244 + $0x54] sm:$0xf] %vm1864, %v1821
        %1887 = vst.msk [vmem:[%s244 + $0x58] sm:$0xf] %vm1864, %v1822
        %1888 = vst.msk [vmem:[%s244 + $0x5c] sm:$0xf] %vm1864, %v1823
        %1889 = vst.msk [vmem:[%s244 + $0x60] sm:$0xf] %vm1864, %v1824
        %1890 = vst.msk [vmem:[%s244 + $0x64] sm:$0xf] %vm1864, %v1825
        %1891 = vst.msk [vmem:[%s244 + $0x68] sm:$0xf] %vm1864, %v1826
        %1892 = vst.msk [vmem:[%s244 + $0x6c] sm:$0xf] %vm1864, %v1827
        %1893 = vst.msk [vmem:[%s244 + $0x70] sm:$0xf] %vm1864, %v1828
        %1894 = vst.msk [vmem:[%s244 + $0x74] sm:$0xf] %vm1864, %v1829
        %1895 = vst.msk [vmem:[%s244 + $0x78] sm:$0xf] %vm1864, %v1830
        %1896 = vst.msk [vmem:[%s244 + $0x7c] sm:$0xf] %vm1864, %v1831
        %s1897 = sand.u32 %s159, 1
        %s1898 = scalar_lea.sflag [#allocation3], %s1897
        %s1899 = sand.u32 %s159, 1
        %s1900 = smul.addr %s1899, 128
        %s1901 = scalar_lea.vmem [#allocation2], %s1900
        // Predicated region
        $region45: #{tpu_custom_call.1} parent=43 // pred_check
          %p1902 = pneg %p169
        $region46: #{tpu_custom_call.1} parent=43 // pred_check_branch
          %1904 = sbr.rel (%p1902) target = $region48
        $region47: #{tpu_custom_call.1} parent=43 // pred_region
          %s1906 = ssub.s32 2048, 2048
          %1907 = vsyncadd %s1898, %s1906
          %s1908 = smul.addr %s20, 32
          %s1909 = smul.addr %s1908, 64
          %s1910 = scalar_lea.hbm %s6, %s1909
          %s1911 = sshll.u32 %s1901, 4
          %s1912 = int_to_ptr.vmem [resolvable:$true] %s1911
          %1917 = dma.vmem_to_hbm [thread:$0]  %s1912, 2048, %s1910, %s1898, 64, 64, 4
        $region48: #{tpu_custom_call.1} parent=43 // pred_fallthru
          _
      $region44: #{tpu_custom_call.1} parent=5 // pred_fallthru
        _
      %p1918 = scmp.le.s32.totalorder 2, %s15
      // Predicated region
      $region49: #{tpu_custom_call.1} parent=5 // pred_check
        %p1919 = pneg %p1918
      $region50: #{tpu_custom_call.1} parent=5 // pred_check_branch
        %1921 = sbr.rel (%p1919) target = $region52
      $region51: #{tpu_custom_call.1} parent=5 // pred_region
        %s1922 = ssub.s32 %s15, 2
        // Predicated region
        $region53: #{tpu_custom_call.1} parent=51 // pred_check
          %p1923 = pneg %p175
        $region54: #{tpu_custom_call.1} parent=51 // pred_check_branch
          %1925 = sbr.rel (%p1923) target = $region56
        $region55: #{tpu_custom_call.1} parent=51 // pred_region
          %s1926 = sand.u32 %s160, 1
          %s1927 = scalar_lea.sflag [#allocation3], %s1926
          %s1928 = sand.u32 %s160, 1
          %s1929 = smul.addr %s1928, 128
          %s1930 = scalar_lea.vmem [#allocation2], %s1929
          %1931 = dma.done %s1927, 2048
        $region56: #{tpu_custom_call.1} parent=51 // pred_fallthru
          _
      $region52: #{tpu_custom_call.1} parent=5 // pred_fallthru
        _
    $region6: #{tpu_custom_call.1} parent=1 // loop_footer
      %s19 = sadd.s32 1, %s15
    $region7: #{tpu_custom_call.1} parent=1 // loop_footer_branch
      %14 = sbr.rel target = $region3
    $region8: #{tpu_custom_call.1} parent=1 // loop_exit
      _
    %1932 = vsyncpa [#allocation3], 1
    %s1933 = scalar_lea.sflag [#allocation3], 1
    %1934 = vsyncpa %s1933, 1

</llo_original>
